<compile_context>
chip_gen: v7x
topology: tpu7x:2x2x1
jax: 0.10.0
libtpu: 0.0.40
codegen_flags: <defaults>
</compile_context>

<pallas_src>
import math
import jax
import jax.numpy as jnp
from jax.experimental import pallas as pl
from jax.experimental.pallas import tpu as pltpu


def _round_up(x, m):
    return ((x + m - 1) // m) * m


def _layernorm(x, w, b, eps=1e-5):
    mu = jnp.mean(x, axis=-1, keepdims=True)
    var = jnp.mean(jnp.square(x - mu), axis=-1, keepdims=True)
    return (x - mu) * jax.lax.rsqrt(var + eps) * w + b


def _vmem_cap_bytes():
    try:
        return int(pltpu.get_tpu_info().vmem_capacity_bytes)
    except Exception:
        return 64 * 1024 * 1024  # conservative (v7x per-TC) fallback


# Row indices inside the packed per-layer vector slab (L, 16, H).
(_LN1_W, _LN1_B, _LN2_W, _LN2_B, _TF, _NEG_EXP_TD,
 _MK, _OMK, _MV, _OMV, _MR, _OMR, _FMK, _OFMK, _FMR, _OFMR) = range(16)


def _rwkv_layers_kernel(
    # -------- inputs --------
    x_in_ref,       # (B, H)    f32  embedded token (resident, constant index)
    ln0_ref,        # (2, H)    f32  rows [w, b] of ln0 (layer-0 only)
    vec_ref,        # (16, H)   f32  packed per-layer vectors
    w_hh_ref,       # (H, 5H+F) bf16 [att_k | att_v | att_r | att_o | ffn_r | ffn_k]
    ffn_vw_ref,     # (F, H)    bf16 ffn value weight
    state_ref,      # (5, B, H) f32  [A, B, p, x, ffn] of this layer
    # -------- outputs --------
    x_out_ref,      # (B, H)    f32  residual stream; resident across layers,
                    #                written every layer (no revisit reliance)
    new_state_ref,  # (5, B, H) f32  new [A, B, p, x, ffn] of this layer
):
    layer = pl.program_id(0)
    H = x_in_ref.shape[-1]
    bf16 = jnp.bfloat16
    f32 = jnp.float32

    # Layer 0: apply ln0 to the embedded input and seed the residual carry.
    @pl.when(layer == 0)
    def _():
        x_out_ref[...] = _layernorm(x_in_ref[...], ln0_ref[0:1, :], ln0_ref[1:2, :])

    x = x_out_ref[...]                               # (B, H) residual carry

    sA = state_ref[0]
    sB = state_ref[1]
    sP = state_ref[2]
    sX = state_ref[3]
    sF = state_ref[4]                                # (B, H) each

    # ---------------- RWKV_TimeMix (attention branch) ----------------
    x1 = _layernorm(x, vec_ref[_LN1_W:_LN1_W + 1, :], vec_ref[_LN1_B:_LN1_B + 1, :])
    xk = x1 * vec_ref[_MK:_MK + 1, :] + sX * vec_ref[_OMK:_OMK + 1, :]
    xv = x1 * vec_ref[_MV:_MV + 1, :] + sX * vec_ref[_OMV:_OMV + 1, :]
    xr = x1 * vec_ref[_MR:_MR + 1, :] + sX * vec_ref[_OMR:_OMR + 1, :]

    k = jnp.dot(xk.astype(bf16), w_hh_ref[:, 0:H], preferred_element_type=f32)
    v = jnp.dot(xv.astype(bf16), w_hh_ref[:, H:2 * H], preferred_element_type=f32)
    r = jax.nn.sigmoid(
        jnp.dot(xr.astype(bf16), w_hh_ref[:, 2 * H:3 * H], preferred_element_type=f32))

    ww = vec_ref[_TF:_TF + 1, :] + k
    p = jnp.maximum(sP, ww)
    e1 = jnp.exp(sP - p)
    e2 = jnp.exp(ww - p)
    a = e1 * sA + e2 * v
    bden = e1 * sB + e2

    ww2 = sP + vec_ref[_NEG_EXP_TD:_NEG_EXP_TD + 1, :]     # sP + (-exp(time_decay))
    p2 = jnp.maximum(ww2, k)
    e1b = jnp.exp(ww2 - p2)
    e2b = jnp.exp(k - p2)
    nA = e1b * sA + e2b * v
    nB = e1b * sB + e2b

    rwkv = r * a * pl.reciprocal(bden, approx=True)
    x = x + jnp.dot(rwkv.astype(bf16), w_hh_ref[:, 3 * H:4 * H],
                    preferred_element_type=f32)

    # ---------------- RWKV_ChannelMix (ffn branch) ----------------
    x2 = _layernorm(x, vec_ref[_LN2_W:_LN2_W + 1, :], vec_ref[_LN2_B:_LN2_B + 1, :])
    xk2 = x2 * vec_ref[_FMK:_FMK + 1, :] + sF * vec_ref[_OFMK:_OFMK + 1, :]
    xr2 = x2 * vec_ref[_FMR:_FMR + 1, :] + sF * vec_ref[_OFMR:_OFMR + 1, :]
    rr = jax.nn.sigmoid(
        jnp.dot(xr2.astype(bf16), w_hh_ref[:, 4 * H:5 * H], preferred_element_type=f32))
    kk = jnp.square(jax.nn.relu(
        jnp.dot(xk2.astype(bf16), w_hh_ref[:, 5 * H:], preferred_element_type=f32)))
    kv = jnp.dot(kk.astype(bf16), ffn_vw_ref[...], preferred_element_type=f32)
    x = x + rr * kv

    # carry residual stream (written every layer); write new state planes.
    x_out_ref[...] = x
    new_state_ref[0] = nA
    new_state_ref[1] = nB
    new_state_ref[2] = p2
    new_state_ref[3] = x1
    new_state_ref[4] = x2


def _head_kernel(x_ref, lnout_ref, w_ref, o_ref):
    # ln_out is folded here (recomputed per vocab tile -- trivially cheap at B=8
    # and keeps the layer kernel free of last-layer special casing).
    xo = _layernorm(x_ref[...], lnout_ref[0:1, :], lnout_ref[1:2, :])
    o_ref[...] = jnp.dot(xo.astype(jnp.bfloat16), w_ref[...],
                         preferred_element_type=jnp.float32)


def pack_params(params, head_tile=2048):
    """One-time packing of parameters into DMA-friendly slabs (call once at load)."""
    f32 = jnp.float32
    one = jnp.float32(1.0)
    vec_slab = jnp.stack([
        params["ln1_w"], params["ln1_b"],
        params["ln2_w"], params["ln2_b"],
        params["att_tf"], -jnp.exp(params["att_td"]),
        params["att_mk"], one - params["att_mk"],
        params["att_mv"], one - params["att_mv"],
        params["att_mr"], one - params["att_mr"],
        params["ffn_mk"], one - params["ffn_mk"],
        params["ffn_mr"], one - params["ffn_mr"],
    ], axis=1).astype(f32)                                   # (L, 16, H)
    w_hh = jnp.concatenate([
        params["att_kw"], params["att_vw"], params["att_rw"], params["att_ow"],
        params["ffn_rw"], params["ffn_kw"],
    ], axis=-1).astype(jnp.bfloat16)                         # (L, H, 5H+F)

    # lm head: pad the vocab dim so it tiles into lane-dense, 256-aligned chunks.
    head_w = params["head_w"].astype(jnp.bfloat16)           # (H, V)
    V = head_w.shape[-1]
    tv = min(head_tile, _round_up(V, 256))                   # multiple of 256
    Vp = _round_up(V, tv)
    if Vp != V:
        head_w = jnp.pad(head_w, ((0, 0), (0, Vp - V)))      # zero cols -> zero logits

    return dict(
        ln0=jnp.stack([params["ln0_w"], params["ln0_b"]], 0).astype(f32),     # (2,H)
        lnout=jnp.stack([params["lnout_w"], params["lnout_b"]], 0).astype(f32),
        vec_slab=vec_slab,
        w_hh=w_hh,
        ffn_vw=params["ffn_vw"].astype(jnp.bfloat16),        # (L, F, H)
        head_w=head_w,                                       # (H, Vp) padded
        head_tile=int(tv),
        vocab=int(V),
    )


def rwkv_v4_infer(x, hidden_state, packed):
    """x: (B,H) f32 (already embedded); hidden_state: (5,L,B,H) [A,B,p,x,ffn]."""
    B, H = x.shape
    L, _, W = packed["w_hh"].shape
    F = W - 5 * H
    Vp = packed["head_w"].shape[-1]
    V = packed["vocab"]
    tv = packed["head_tile"]

    vmem_cap = _vmem_cap_bytes()

    # ---------------- per-layer streaming kernel ----------------
    state_spec = pl.BlockSpec((5, pl.Squeezed(), B, H), lambda i: (0, i, 0, 0))
    grid_spec = pltpu.PrefetchScalarGridSpec(
        num_scalar_prefetch=0,
        grid=(L,),
        in_specs=[
            pl.BlockSpec((B, H), lambda i: (0, 0)),                            # x_in
            pl.BlockSpec((2, H), lambda i: (0, 0)),                            # ln0
            pl.BlockSpec((pl.Squeezed(), 16, H), lambda i: (i, 0, 0)),         # vectors
            pl.BlockSpec((pl.Squeezed(), H, 5 * H + F), lambda i: (i, 0, 0)),  # w_hh
            pl.BlockSpec((pl.Squeezed(), F, H), lambda i: (i, 0, 0)),          # ffn value
            state_spec,                                                        # state in
        ],
        out_specs=(
            pl.BlockSpec((B, H), lambda i: (0, 0)),                            # x_out
            state_spec,                                                        # state out
        ),
    )
    out_shape = (jax.ShapeDtypeStruct((B, H), jnp.float32),
                 jax.ShapeDtypeStruct((5, L, B, H), jnp.float32))

    # Double-buffered per-layer footprint (no extra outer 2x) + resident blocks,
    # capped at physical VMEM minus headroom.
    layer_w_bytes = (H * (5 * H + F) + F * H) * 2            # bf16 weights
    layer_bytes = (2 * (layer_w_bytes + 16 * H * 4 + 2 * 5 * B * H * 4)
                   + 2 * B * H * 4 + 2 * H * 4)
    vmem_limit = int(min(vmem_cap - 16 * 1024 * 1024,
                         max(32 * 1024 * 1024, layer_bytes + 4 * 1024 * 1024)))

    layer_cost = pl.CostEstimate(
        flops=int(2 * B * (H * (5 * H + F) + F * H) * L),
        transcendentals=int(8 * B * H * L),
        bytes_accessed=int(L * (layer_w_bytes + 16 * H * 4 + 2 * 5 * B * H * 4)
                           + 2 * B * H * 4 + 2 * H * 4),
    )

    x_out, new_hidden = pl.pallas_call(
        _rwkv_layers_kernel,
        grid_spec=grid_spec,
        out_shape=out_shape,
        # hidden_state (input 5) is updated in place as new_hidden (output 1).
        input_output_aliases={5: 1},
        cost_estimate=layer_cost,
        compiler_params=pltpu.CompilerParams(
            dimension_semantics=("arbitrary",),        # sequential residual carry
            vmem_limit_bytes=vmem_limit),
    )(x, packed["ln0"], packed["vec_slab"],
      packed["w_hh"], packed["ffn_vw"], hidden_state)

    # ---------------- lm head: vocab-tiled weight-streaming GEMM ----------------
    head_bytes = H * Vp * 2 + B * Vp * 4 + B * H * 4 + 2 * H * 4
    head_cost = pl.CostEstimate(flops=int(2 * B * H * Vp), transcendentals=0,
                                bytes_accessed=int(head_bytes))
    head_vmem = int(min(vmem_cap - 16 * 1024 * 1024,
                        max(32 * 1024 * 1024,
                            2 * (H * tv * 2 + B * tv * 4) + 2 * B * H * 4)))

    logits_p = pl.pallas_call(
        _head_kernel,
        out_shape=jax.ShapeDtypeStruct((B, Vp), jnp.float32),
        grid_spec=pltpu.PrefetchScalarGridSpec(
            num_scalar_prefetch=0,
            grid=(Vp // tv,),
            in_specs=[pl.BlockSpec((B, H), lambda j: (0, 0)),
                      pl.BlockSpec((2, H), lambda j: (0, 0)),
                      pl.BlockSpec((H, tv), lambda j: (0, j))],
            out_specs=pl.BlockSpec((B, tv), lambda j: (0, j)),
        ),
        cost_estimate=head_cost,
        compiler_params=pltpu.CompilerParams(
            dimension_semantics=("parallel",),
            vmem_limit_bytes=head_vmem),
    )(x_out, packed["lnout"], packed["head_w"])

    logits = logits_p[:, :V] if Vp != V else logits_p
    return logits, new_hidden


def init_params(key, L, H, FF, V):
    ks = jax.random.split(key, 14)

    def lin(k, din, dout):
        w = jax.random.normal(k, (L, din, dout), jnp.float32) / math.sqrt(din)
        return w.astype(jnp.bfloat16)

    def mix(k, shape):
        return jax.random.uniform(k, shape, jnp.float32, 0.1, 0.9)

    return dict(
        ln0_w=jnp.ones((H,), jnp.float32), ln0_b=jnp.zeros((H,), jnp.float32),
        ln1_w=jnp.ones((L, H), jnp.float32), ln1_b=jnp.zeros((L, H), jnp.float32),
        ln2_w=jnp.ones((L, H), jnp.float32), ln2_b=jnp.zeros((L, H), jnp.float32),
        att_td=jax.random.uniform(ks[0], (L, H), jnp.float32, -1.0, 0.0),
        att_tf=jnp.full((L, H), math.log(0.3), jnp.float32),
        att_mk=mix(ks[1], (L, H)),
        att_mv=mix(ks[2], (L, H)),
        att_mr=mix(ks[3], (L, H)),
        att_kw=lin(ks[4], H, H),
        att_vw=lin(ks[5], H, H),
        att_rw=lin(ks[6], H, H),
        att_ow=lin(ks[7], H, H),
        ffn_mk=mix(ks[8], (L, H)),
        ffn_mr=mix(ks[9], (L, H)),
        ffn_kw=lin(ks[10], H, FF),
        ffn_rw=lin(ks[11], H, H),
        ffn_vw=lin(ks[12], FF, H),
        lnout_w=jnp.ones((H,), jnp.float32), lnout_b=jnp.zeros((H,), jnp.float32),
        head_w=(jax.random.normal(ks[13], (H, V), jnp.float32)
                / math.sqrt(H)).astype(jnp.bfloat16),
    )


def _bdot(a, w):
    # match the kernel: bf16 x bf16 MXU dot with f32 accumulation
    return jnp.dot(a.astype(jnp.bfloat16), w, preferred_element_type=jnp.float32)


def ref_forward(x, hidden, params):
    """Pure-JAX reference mirroring the PyTorch module (bf16 weights), for validation."""
    def ln(z, w, b):
        mu = z.mean(-1, keepdims=True)
        var = ((z - mu) ** 2).mean(-1, keepdims=True)
        return (z - mu) * jax.lax.rsqrt(var + 1e-5) * w + b

    sA, sB, sP, sX, sF = [hidden[i] for i in range(5)]
    L = sA.shape[0]
    nAs, nBs, nPs, nXs, nFs = [], [], [], [], []
    for i in range(L):
        if i == 0:
            x = ln(x, params["ln0_w"], params["ln0_b"])
        sc = x
        x1 = ln(x, params["ln1_w"][i], params["ln1_b"][i])
        mk, mv, mr = params["att_mk"][i], params["att_mv"][i], params["att_mr"][i]
        xk = x1 * mk + sX[i] * (1 - mk)
        xv = x1 * mv + sX[i] * (1 - mv)
        xr = x1 * mr + sX[i] * (1 - mr)
        k = _bdot(xk, params["att_kw"][i])
        v = _bdot(xv, params["att_vw"][i])
        r = jax.nn.sigmoid(_bdot(xr, params["att_rw"][i]))
        ww = params["att_tf"][i] + k
        p = jnp.maximum(sP[i], ww)
        e1, e2 = jnp.exp(sP[i] - p), jnp.exp(ww - p)
        a, bb = e1 * sA[i] + e2 * v, e1 * sB[i] + e2
        ww2 = sP[i] - jnp.exp(params["att_td"][i])
        p2 = jnp.maximum(ww2, k)
        e1b, e2b = jnp.exp(ww2 - p2), jnp.exp(k - p2)
        nAs.append(e1b * sA[i] + e2b * v)
        nBs.append(e1b * sB[i] + e2b)
        nPs.append(p2)
        nXs.append(x1)
        x = sc + _bdot(r * a / bb, params["att_ow"][i])
        sc = x
        x2 = ln(x, params["ln2_w"][i], params["ln2_b"][i])
        fmk, fmr = params["ffn_mk"][i], params["ffn_mr"][i]
        xk2 = x2 * fmk + sF[i] * (1 - fmk)
        xr2 = x2 * fmr + sF[i] * (1 - fmr)
        rr = jax.nn.sigmoid(_bdot(xr2, params["ffn_rw"][i]))
        kk = jnp.square(jax.nn.relu(_bdot(xk2, params["ffn_kw"][i])))
        x = sc + rr * _bdot(kk, params["ffn_vw"][i])
        nFs.append(x2)
    xo = ln(x, params["lnout_w"], params["lnout_b"])
    logits = _bdot(xo, params["head_w"])
    new_hidden = jnp.stack([jnp.stack(s, 0) for s in (nAs, nBs, nPs, nXs, nFs)], 0)
    return logits, new_hidden


if __name__ == "__main__":
    B, H, FF, V, L = 8, 128, 256, 256, 2   # batch, hidden, ffn_dim, vocab, layers

    key = jax.random.PRNGKey(0)
    kx, kp = jax.random.split(key)
    # NOTE: the PyTorch forward takes an already-embedded x (B, H); emb is unused.
    x = jax.random.normal(kx, (B, H), jnp.float32)
    params = init_params(kp, L, H, FF, V)
    packed = pack_params(params)

    # forward_initialzation: A=B=x=ffn=0, p=-1e30, stacked as (5, L, B, H)
    hidden = jnp.stack([
        jnp.zeros((L, B, H), jnp.float32),
        jnp.zeros((L, B, H), jnp.float32),
        jnp.full((L, B, H), -1e30, jnp.float32),
        jnp.zeros((L, B, H), jnp.float32),
        jnp.zeros((L, B, H), jnp.float32),
    ])

    # Reference first (in a real decode loop the aliased state buffer would be
    # donated; here the original `hidden` stays valid because it is a parameter).
    ref_logits, ref_hidden = ref_forward(x, hidden, params)

    logits, new_hidden = jax.block_until_ready(rwkv_v4_infer(x, hidden, packed))

    assert logits.shape == (B, V) and new_hidden.shape == (5, L, B, H)
    # bf16 weights + approx reciprocal on the EUP path -> 1e-2 tolerance.
    assert jnp.allclose(logits, ref_logits, atol=1e-2, rtol=1e-2)
    assert jnp.allclose(new_hidden, ref_hidden, atol=1e-2, rtol=1e-2)

    print("KERNEL_OK")
</pallas_src>

<mosaic_0001>
module attributes {stable_mosaic.version = 11 : i64} {
  func.func @_rwkv_layers_kernel(%arg0: i32, %arg1: memref<8x128xf32, #tpu.memory_space<vmem>>, %arg2: memref<2x128xf32, #tpu.memory_space<vmem>>, %arg3: memref<1x16x128xf32, #tpu.memory_space<vmem>>, %arg4: memref<1x128x896xbf16, #tpu.memory_space<vmem>>, %arg5: memref<1x256x128xbf16, #tpu.memory_space<vmem>>, %arg6: memref<5x1x8x128xf32, #tpu.memory_space<vmem>>, %arg7: memref<8x128xf32, #tpu.memory_space<vmem>>, %arg8: memref<5x1x8x128xf32, #tpu.memory_space<vmem>>) attributes {dimension_semantics = [#tpu.dimension_semantics<arbitrary>], iteration_bounds = array<i64: 2>, scalar_prefetch = 0 : i64, scratch_operands = 0 : i64, tpu.core_type = #tpu.core_type<tc>, window_params = [{pipeline_mode = #tpu.pipeline_mode<synchronous>, transform_indices = @transform_0, window_bounds = array<i64: 8, 128>}, {pipeline_mode = #tpu.pipeline_mode<synchronous>, transform_indices = @transform_1, window_bounds = array<i64: 2, 128>}, {transform_indices = @transform_2, window_bounds = array<i64: 1, 16, 128>}, {transform_indices = @transform_3, window_bounds = array<i64: 1, 128, 896>}, {transform_indices = @transform_4, window_bounds = array<i64: 1, 256, 128>}, {transform_indices = @transform_5, window_bounds = array<i64: 5, 1, 8, 128>}, {pipeline_mode = #tpu.pipeline_mode<synchronous>, transform_indices = @transform_6, window_bounds = array<i64: 8, 128>}, {transform_indices = @transform_7, window_bounds = array<i64: 5, 1, 8, 128>}]} {
    %c0_i32 = arith.constant 0 : i32
    %0 = arith.cmpi eq, %arg0, %c0_i32 : i32
    %1 = arith.extui %0 : i1 to i32
    %c0_i32_0 = arith.constant 0 : i32
    %2 = arith.cmpi ne, %1, %c0_i32_0 : i32
    scf.if %2 {
      %c0_112 = arith.constant 0 : index
      %c0_113 = arith.constant 0 : index
      %202 = vector.load %arg1[%c0_112, %c0_113] : memref<8x128xf32, #tpu.memory_space<vmem>>, vector<8x128xf32>
      %c0_114 = arith.constant 0 : index
      %c0_115 = arith.constant 0 : index
      %203 = vector.load %arg2[%c0_114, %c0_115] : memref<2x128xf32, #tpu.memory_space<vmem>>, vector<1x128xf32>
      %c1_116 = arith.constant 1 : index
      %c0_117 = arith.constant 0 : index
      %204 = vector.load %arg2[%c1_116, %c0_117] : memref<2x128xf32, #tpu.memory_space<vmem>>, vector<1x128xf32>
      %cst_118 = arith.constant dense<0.000000e+00> : vector<8xf32>
      %205 = vector.multi_reduction <add>, %202, %cst_118 [1] : vector<8x128xf32> to vector<8xf32>
      %206 = vector.shape_cast %205 : vector<8xf32> to vector<8x1xf32>
      %cst_119 = arith.constant 1.280000e+02 : f32
      %207 = vector.broadcast %cst_119 : f32 to vector<8x1xf32>
      %208 = arith.divf %206, %207 : vector<8x1xf32>
      %209 = vector.broadcast %208 : vector<8x1xf32> to vector<8x128xf32>
      %210 = arith.subf %202, %209 : vector<8x128xf32>
      %211 = arith.mulf %210, %210 : vector<8x128xf32>
      %cst_120 = arith.constant dense<0.000000e+00> : vector<8xf32>
      %212 = vector.multi_reduction <add>, %211, %cst_120 [1] : vector<8x128xf32> to vector<8xf32>
      %213 = vector.shape_cast %212 : vector<8xf32> to vector<8x1xf32>
      %cst_121 = arith.constant 1.280000e+02 : f32
      %214 = vector.broadcast %cst_121 : f32 to vector<8x1xf32>
      %215 = arith.divf %213, %214 : vector<8x1xf32>
      %216 = vector.broadcast %208 : vector<8x1xf32> to vector<8x128xf32>
      %217 = arith.subf %202, %216 : vector<8x128xf32>
      %cst_122 = arith.constant 9.99999974E-6 : f32
      %218 = vector.broadcast %cst_122 : f32 to vector<8x1xf32>
      %219 = arith.addf %215, %218 : vector<8x1xf32>
      %220 = math.rsqrt %219 : vector<8x1xf32>
      %221 = vector.broadcast %220 : vector<8x1xf32> to vector<8x128xf32>
      %222 = arith.mulf %217, %221 : vector<8x128xf32>
      %223 = vector.broadcast %203 : vector<1x128xf32> to vector<8x128xf32>
      %224 = arith.mulf %222, %223 : vector<8x128xf32>
      %225 = vector.broadcast %204 : vector<1x128xf32> to vector<8x128xf32>
      %226 = arith.addf %224, %225 : vector<8x128xf32>
      %c0_123 = arith.constant 0 : index
      %c0_124 = arith.constant 0 : index
      %227 = vector.load %arg7[%c0_123, %c0_124] : memref<8x128xf32, #tpu.memory_space<vmem>>, vector<8x128xf32>
      tpu.vector_store %arg7[%c0_123, %c0_124], %226 {strides = array<i32>} : memref<8x128xf32, #tpu.memory_space<vmem>>, vector<8x128xf32>,
    } else {
    }
    %c0 = arith.constant 0 : index
    %c0_1 = arith.constant 0 : index
    %3 = vector.load %arg7[%c0, %c0_1] : memref<8x128xf32, #tpu.memory_space<vmem>>, vector<8x128xf32>
    %c0_2 = arith.constant 0 : index
    %c0_3 = arith.constant 0 : index
    %c0_4 = arith.constant 0 : index
    %c0_5 = arith.constant 0 : index
    %4 = vector.load %arg6[%c0_2, %c0_3, %c0_4, %c0_5] : memref<5x1x8x128xf32, #tpu.memory_space<vmem>>, vector<1x1x8x128xf32>
    %5 = vector.shape_cast %4 : vector<1x1x8x128xf32> to vector<8x128xf32>
    %c1 = arith.constant 1 : index
    %c0_6 = arith.constant 0 : index
    %c0_7 = arith.constant 0 : index
    %c0_8 = arith.constant 0 : index
    %6 = vector.load %arg6[%c1, %c0_6, %c0_7, %c0_8] : memref<5x1x8x128xf32, #tpu.memory_space<vmem>>, vector<1x1x8x128xf32>
    %7 = vector.shape_cast %6 : vector<1x1x8x128xf32> to vector<8x128xf32>
    %c2 = arith.constant 2 : index
    %c0_9 = arith.constant 0 : index
    %c0_10 = arith.constant 0 : index
    %c0_11 = arith.constant 0 : index
    %8 = vector.load %arg6[%c2, %c0_9, %c0_10, %c0_11] : memref<5x1x8x128xf32, #tpu.memory_space<vmem>>, vector<1x1x8x128xf32>
    %9 = vector.shape_cast %8 : vector<1x1x8x128xf32> to vector<8x128xf32>
    %c3 = arith.constant 3 : index
    %c0_12 = arith.constant 0 : index
    %c0_13 = arith.constant 0 : index
    %c0_14 = arith.constant 0 : index
    %10 = vector.load %arg6[%c3, %c0_12, %c0_13, %c0_14] : memref<5x1x8x128xf32, #tpu.memory_space<vmem>>, vector<1x1x8x128xf32>
    %11 = vector.shape_cast %10 : vector<1x1x8x128xf32> to vector<8x128xf32>
    %c4 = arith.constant 4 : index
    %c0_15 = arith.constant 0 : index
    %c0_16 = arith.constant 0 : index
    %c0_17 = arith.constant 0 : index
    %12 = vector.load %arg6[%c4, %c0_15, %c0_16, %c0_17] : memref<5x1x8x128xf32, #tpu.memory_space<vmem>>, vector<1x1x8x128xf32>
    %13 = vector.shape_cast %12 : vector<1x1x8x128xf32> to vector<8x128xf32>
    %c0_18 = arith.constant 0 : index
    %c0_19 = arith.constant 0 : index
    %c0_20 = arith.constant 0 : index
    %14 = vector.load %arg3[%c0_18, %c0_19, %c0_20] : memref<1x16x128xf32, #tpu.memory_space<vmem>>, vector<1x1x128xf32>
    %15 = vector.shape_cast %14 : vector<1x1x128xf32> to vector<1x128xf32>
    %c0_21 = arith.constant 0 : index
    %c1_22 = arith.constant 1 : index
    %c0_23 = arith.constant 0 : index
    %16 = vector.load %arg3[%c0_21, %c1_22, %c0_23] : memref<1x16x128xf32, #tpu.memory_space<vmem>>, vector<1x1x128xf32>
    %17 = vector.shape_cast %16 : vector<1x1x128xf32> to vector<1x128xf32>
    %cst = arith.constant dense<0.000000e+00> : vector<8xf32>
    %18 = vector.multi_reduction <add>, %3, %cst [1] : vector<8x128xf32> to vector<8xf32>
    %19 = vector.shape_cast %18 : vector<8xf32> to vector<8x1xf32>
    %cst_24 = arith.constant 1.280000e+02 : f32
    %20 = vector.broadcast %cst_24 : f32 to vector<8x1xf32>
    %21 = arith.divf %19, %20 : vector<8x1xf32>
    %22 = vector.broadcast %21 : vector<8x1xf32> to vector<8x128xf32>
    %23 = arith.subf %3, %22 : vector<8x128xf32>
    %24 = arith.mulf %23, %23 : vector<8x128xf32>
    %cst_25 = arith.constant dense<0.000000e+00> : vector<8xf32>
    %25 = vector.multi_reduction <add>, %24, %cst_25 [1] : vector<8x128xf32> to vector<8xf32>
    %26 = vector.shape_cast %25 : vector<8xf32> to vector<8x1xf32>
    %cst_26 = arith.constant 1.280000e+02 : f32
    %27 = vector.broadcast %cst_26 : f32 to vector<8x1xf32>
    %28 = arith.divf %26, %27 : vector<8x1xf32>
    %29 = vector.broadcast %21 : vector<8x1xf32> to vector<8x128xf32>
    %30 = arith.subf %3, %29 : vector<8x128xf32>
    %cst_27 = arith.constant 9.99999974E-6 : f32
    %31 = vector.broadcast %cst_27 : f32 to vector<8x1xf32>
    %32 = arith.addf %28, %31 : vector<8x1xf32>
    %33 = math.rsqrt %32 : vector<8x1xf32>
    %34 = vector.broadcast %33 : vector<8x1xf32> to vector<8x128xf32>
    %35 = arith.mulf %30, %34 : vector<8x128xf32>
    %36 = vector.broadcast %15 : vector<1x128xf32> to vector<8x128xf32>
    %37 = arith.mulf %35, %36 : vector<8x128xf32>
    %38 = vector.broadcast %17 : vector<1x128xf32> to vector<8x128xf32>
    %39 = arith.addf %37, %38 : vector<8x128xf32>
    %c0_28 = arith.constant 0 : index
    %c6 = arith.constant 6 : index
    %c0_29 = arith.constant 0 : index
    %40 = vector.load %arg3[%c0_28, %c6, %c0_29] : memref<1x16x128xf32, #tpu.memory_space<vmem>>, vector<1x1x128xf32>
    %41 = vector.shape_cast %40 : vector<1x1x128xf32> to vector<1x128xf32>
    %42 = vector.broadcast %41 : vector<1x128xf32> to vector<8x128xf32>
    %43 = arith.mulf %39, %42 : vector<8x128xf32>
    %c0_30 = arith.constant 0 : index
    %c7 = arith.constant 7 : index
    %c0_31 = arith.constant 0 : index
    %44 = vector.load %arg3[%c0_30, %c7, %c0_31] : memref<1x16x128xf32, #tpu.memory_space<vmem>>, vector<1x1x128xf32>
    %45 = vector.shape_cast %44 : vector<1x1x128xf32> to vector<1x128xf32>
    %46 = vector.broadcast %45 : vector<1x128xf32> to vector<8x128xf32>
    %47 = arith.mulf %11, %46 : vector<8x128xf32>
    %48 = arith.addf %43, %47 : vector<8x128xf32>
    %c0_32 = arith.constant 0 : index
    %c8 = arith.constant 8 : index
    %c0_33 = arith.constant 0 : index
    %49 = vector.load %arg3[%c0_32, %c8, %c0_33] : memref<1x16x128xf32, #tpu.memory_space<vmem>>, vector<1x1x128xf32>
    %50 = vector.shape_cast %49 : vector<1x1x128xf32> to vector<1x128xf32>
    %51 = vector.broadcast %50 : vector<1x128xf32> to vector<8x128xf32>
    %52 = arith.mulf %39, %51 : vector<8x128xf32>
    %c0_34 = arith.constant 0 : index
    %c9 = arith.constant 9 : index
    %c0_35 = arith.constant 0 : index
    %53 = vector.load %arg3[%c0_34, %c9, %c0_35] : memref<1x16x128xf32, #tpu.memory_space<vmem>>, vector<1x1x128xf32>
    %54 = vector.shape_cast %53 : vector<1x1x128xf32> to vector<1x128xf32>
    %55 = vector.broadcast %54 : vector<1x128xf32> to vector<8x128xf32>
    %56 = arith.mulf %11, %55 : vector<8x128xf32>
    %57 = arith.addf %52, %56 : vector<8x128xf32>
    %c0_36 = arith.constant 0 : index
    %c10 = arith.constant 10 : index
    %c0_37 = arith.constant 0 : index
    %58 = vector.load %arg3[%c0_36, %c10, %c0_37] : memref<1x16x128xf32, #tpu.memory_space<vmem>>, vector<1x1x128xf32>
    %59 = vector.shape_cast %58 : vector<1x1x128xf32> to vector<1x128xf32>
    %60 = vector.broadcast %59 : vector<1x128xf32> to vector<8x128xf32>
    %61 = arith.mulf %39, %60 : vector<8x128xf32>
    %c0_38 = arith.constant 0 : index
    %c11 = arith.constant 11 : index
    %c0_39 = arith.constant 0 : index
    %62 = vector.load %arg3[%c0_38, %c11, %c0_39] : memref<1x16x128xf32, #tpu.memory_space<vmem>>, vector<1x1x128xf32>
    %63 = vector.shape_cast %62 : vector<1x1x128xf32> to vector<1x128xf32>
    %64 = vector.broadcast %63 : vector<1x128xf32> to vector<8x128xf32>
    %65 = arith.mulf %11, %64 : vector<8x128xf32>
    %66 = arith.addf %61, %65 : vector<8x128xf32>
    %67 = arith.truncf %48 : vector<8x128xf32> to vector<8x128xbf16>
    %c0_40 = arith.constant 0 : index
    %c0_41 = arith.constant 0 : index
    %c0_42 = arith.constant 0 : index
    %68 = vector.load %arg4[%c0_40, %c0_41, %c0_42] : memref<1x128x896xbf16, #tpu.memory_space<vmem>>, vector<1x128x128xbf16>
    %69 = vector.shape_cast %68 : vector<1x128x128xbf16> to vector<128x128xbf16>
    %cst_43 = arith.constant dense<0.000000e+00> : vector<8x128xf32>
    %70 = tpu.matmul %67, %69, %cst_43 {dimension_numbers = #tpu.dot_dimension_numbers<[1], [0], [0], [1], [0, 0, 1, 1], [], []>} : vector<8x128xbf16>, vector<128x128xbf16>, vector<8x128xf32> -> vector<8x128xf32>
    %71 = arith.truncf %57 : vector<8x128xf32> to vector<8x128xbf16>
    %c0_44 = arith.constant 0 : index
    %c0_45 = arith.constant 0 : index
    %c128 = arith.constant 128 : index
    %72 = vector.load %arg4[%c0_44, %c0_45, %c128] : memref<1x128x896xbf16, #tpu.memory_space<vmem>>, vector<1x128x128xbf16>
    %73 = vector.shape_cast %72 : vector<1x128x128xbf16> to vector<128x128xbf16>
    %cst_46 = arith.constant dense<0.000000e+00> : vector<8x128xf32>
    %74 = tpu.matmul %71, %73, %cst_46 {dimension_numbers = #tpu.dot_dimension_numbers<[1], [0], [0], [1], [0, 0, 1, 1], [], []>} : vector<8x128xbf16>, vector<128x128xbf16>, vector<8x128xf32> -> vector<8x128xf32>
    %75 = arith.truncf %66 : vector<8x128xf32> to vector<8x128xbf16>
    %c0_47 = arith.constant 0 : index
    %c0_48 = arith.constant 0 : index
    %c256 = arith.constant 256 : index
    %76 = vector.load %arg4[%c0_47, %c0_48, %c256] : memref<1x128x896xbf16, #tpu.memory_space<vmem>>, vector<1x128x128xbf16>
    %77 = vector.shape_cast %76 : vector<1x128x128xbf16> to vector<128x128xbf16>
    %cst_49 = arith.constant dense<0.000000e+00> : vector<8x128xf32>
    %78 = tpu.matmul %75, %77, %cst_49 {dimension_numbers = #tpu.dot_dimension_numbers<[1], [0], [0], [1], [0, 0, 1, 1], [], []>} : vector<8x128xbf16>, vector<128x128xbf16>, vector<8x128xf32> -> vector<8x128xf32>
    %79 = arith.negf %78 : vector<8x128xf32>
    %80 = math.exp %79 : vector<8x128xf32>
    %cst_50 = arith.constant 1.000000e+00 : f32
    %81 = vector.broadcast %cst_50 : f32 to vector<8x128xf32>
    %82 = arith.addf %81, %80 : vector<8x128xf32>
    %83 = arith.divf %81, %82 : vector<8x128xf32>
    %c0_51 = arith.constant 0 : index
    %c4_52 = arith.constant 4 : index
    %c0_53 = arith.constant 0 : index
    %84 = vector.load %arg3[%c0_51, %c4_52, %c0_53] : memref<1x16x128xf32, #tpu.memory_space<vmem>>, vector<1x1x128xf32>
    %85 = vector.shape_cast %84 : vector<1x1x128xf32> to vector<1x128xf32>
    %86 = vector.broadcast %85 : vector<1x128xf32> to vector<8x128xf32>
    %87 = arith.addf %86, %70 : vector<8x128xf32>
    %88 = arith.maximumf %9, %87 : vector<8x128xf32>
    %89 = arith.subf %9, %88 : vector<8x128xf32>
    %90 = math.exp %89 : vector<8x128xf32>
    %91 = arith.subf %87, %88 : vector<8x128xf32>
    %92 = math.exp %91 : vector<8x128xf32>
    %93 = arith.mulf %90, %5 : vector<8x128xf32>
    %94 = arith.mulf %92, %74 : vector<8x128xf32>
    %95 = arith.addf %93, %94 : vector<8x128xf32>
    %96 = arith.mulf %90, %7 : vector<8x128xf32>
    %97 = arith.addf %96, %92 : vector<8x128xf32>
    %c0_54 = arith.constant 0 : index
    %c5 = arith.constant 5 : index
    %c0_55 = arith.constant 0 : index
    %98 = vector.load %arg3[%c0_54, %c5, %c0_55] : memref<1x16x128xf32, #tpu.memory_space<vmem>>, vector<1x1x128xf32>
    %99 = vector.shape_cast %98 : vector<1x1x128xf32> to vector<1x128xf32>
    %100 = vector.broadcast %99 : vector<1x128xf32> to vector<8x128xf32>
    %101 = arith.addf %9, %100 : vector<8x128xf32>
    %102 = arith.maximumf %101, %70 : vector<8x128xf32>
    %103 = arith.subf %101, %102 : vector<8x128xf32>
    %104 = math.exp %103 : vector<8x128xf32>
    %105 = arith.subf %70, %102 : vector<8x128xf32>
    %106 = math.exp %105 : vector<8x128xf32>
    %107 = arith.mulf %104, %5 : vector<8x128xf32>
    %108 = arith.mulf %106, %74 : vector<8x128xf32>
    %109 = arith.addf %107, %108 : vector<8x128xf32>
    %110 = arith.mulf %104, %7 : vector<8x128xf32>
    %111 = arith.addf %110, %106 : vector<8x128xf32>
    %112 = arith.mulf %83, %95 : vector<8x128xf32>
    %113 = tpu.reciprocal %97 {approx = true} : vector<8x128xf32> -> vector<8x128xf32>
    %114 = arith.mulf %112, %113 : vector<8x128xf32>
    %115 = arith.truncf %114 : vector<8x128xf32> to vector<8x128xbf16>
    %c0_56 = arith.constant 0 : index
    %c0_57 = arith.constant 0 : index
    %c384 = arith.constant 384 : index
    %116 = vector.load %arg4[%c0_56, %c0_57, %c384] : memref<1x128x896xbf16, #tpu.memory_space<vmem>>, vector<1x128x128xbf16>
    %117 = vector.shape_cast %116 : vector<1x128x128xbf16> to vector<128x128xbf16>
    %cst_58 = arith.constant dense<0.000000e+00> : vector<8x128xf32>
    %118 = tpu.matmul %115, %117, %cst_58 {dimension_numbers = #tpu.dot_dimension_numbers<[1], [0], [0], [1], [0, 0, 1, 1], [], []>} : vector<8x128xbf16>, vector<128x128xbf16>, vector<8x128xf32> -> vector<8x128xf32>
    %119 = arith.addf %3, %118 : vector<8x128xf32>
    %c0_59 = arith.constant 0 : index
    %c2_60 = arith.constant 2 : index
    %c0_61 = arith.constant 0 : index
    %120 = vector.load %arg3[%c0_59, %c2_60, %c0_61] : memref<1x16x128xf32, #tpu.memory_space<vmem>>, vector<1x1x128xf32>
    %121 = vector.shape_cast %120 : vector<1x1x128xf32> to vector<1x128xf32>
    %c0_62 = arith.constant 0 : index
    %c3_63 = arith.constant 3 : index
    %c0_64 = arith.constant 0 : index
    %122 = vector.load %arg3[%c0_62, %c3_63, %c0_64] : memref<1x16x128xf32, #tpu.memory_space<vmem>>, vector<1x1x128xf32>
    %123 = vector.shape_cast %122 : vector<1x1x128xf32> to vector<1x128xf32>
    %cst_65 = arith.constant dense<0.000000e+00> : vector<8xf32>
    %124 = vector.multi_reduction <add>, %119, %cst_65 [1] : vector<8x128xf32> to vector<8xf32>
    %125 = vector.shape_cast %124 : vector<8xf32> to vector<8x1xf32>
    %cst_66 = arith.constant 1.280000e+02 : f32
    %126 = vector.broadcast %cst_66 : f32 to vector<8x1xf32>
    %127 = arith.divf %125, %126 : vector<8x1xf32>
    %128 = vector.broadcast %127 : vector<8x1xf32> to vector<8x128xf32>
    %129 = arith.subf %119, %128 : vector<8x128xf32>
    %130 = arith.mulf %129, %129 : vector<8x128xf32>
    %cst_67 = arith.constant dense<0.000000e+00> : vector<8xf32>
    %131 = vector.multi_reduction <add>, %130, %cst_67 [1] : vector<8x128xf32> to vector<8xf32>
    %132 = vector.shape_cast %131 : vector<8xf32> to vector<8x1xf32>
    %cst_68 = arith.constant 1.280000e+02 : f32
    %133 = vector.broadcast %cst_68 : f32 to vector<8x1xf32>
    %134 = arith.divf %132, %133 : vector<8x1xf32>
    %135 = vector.broadcast %127 : vector<8x1xf32> to vector<8x128xf32>
    %136 = arith.subf %119, %135 : vector<8x128xf32>
    %cst_69 = arith.constant 9.99999974E-6 : f32
    %137 = vector.broadcast %cst_69 : f32 to vector<8x1xf32>
    %138 = arith.addf %134, %137 : vector<8x1xf32>
    %139 = math.rsqrt %138 : vector<8x1xf32>
    %140 = vector.broadcast %139 : vector<8x1xf32> to vector<8x128xf32>
    %141 = arith.mulf %136, %140 : vector<8x128xf32>
    %142 = vector.broadcast %121 : vector<1x128xf32> to vector<8x128xf32>
    %143 = arith.mulf %141, %142 : vector<8x128xf32>
    %144 = vector.broadcast %123 : vector<1x128xf32> to vector<8x128xf32>
    %145 = arith.addf %143, %144 : vector<8x128xf32>
    %c0_70 = arith.constant 0 : index
    %c12 = arith.constant 12 : index
    %c0_71 = arith.constant 0 : index
    %146 = vector.load %arg3[%c0_70, %c12, %c0_71] : memref<1x16x128xf32, #tpu.memory_space<vmem>>, vector<1x1x128xf32>
    %147 = vector.shape_cast %146 : vector<1x1x128xf32> to vector<1x128xf32>
    %148 = vector.broadcast %147 : vector<1x128xf32> to vector<8x128xf32>
    %149 = arith.mulf %145, %148 : vector<8x128xf32>
    %c0_72 = arith.constant 0 : index
    %c13 = arith.constant 13 : index
    %c0_73 = arith.constant 0 : index
    %150 = vector.load %arg3[%c0_72, %c13, %c0_73] : memref<1x16x128xf32, #tpu.memory_space<vmem>>, vector<1x1x128xf32>
    %151 = vector.shape_cast %150 : vector<1x1x128xf32> to vector<1x128xf32>
    %152 = vector.broadcast %151 : vector<1x128xf32> to vector<8x128xf32>
    %153 = arith.mulf %13, %152 : vector<8x128xf32>
    %154 = arith.addf %149, %153 : vector<8x128xf32>
    %c0_74 = arith.constant 0 : index
    %c14 = arith.constant 14 : index
    %c0_75 = arith.constant 0 : index
    %155 = vector.load %arg3[%c0_74, %c14, %c0_75] : memref<1x16x128xf32, #tpu.memory_space<vmem>>, vector<1x1x128xf32>
    %156 = vector.shape_cast %155 : vector<1x1x128xf32> to vector<1x128xf32>
    %157 = vector.broadcast %156 : vector<1x128xf32> to vector<8x128xf32>
    %158 = arith.mulf %145, %157 : vector<8x128xf32>
    %c0_76 = arith.constant 0 : index
    %c15 = arith.constant 15 : index
    %c0_77 = arith.constant 0 : index
    %159 = vector.load %arg3[%c0_76, %c15, %c0_77] : memref<1x16x128xf32, #tpu.memory_space<vmem>>, vector<1x1x128xf32>
    %160 = vector.shape_cast %159 : vector<1x1x128xf32> to vector<1x128xf32>
    %161 = vector.broadcast %160 : vector<1x128xf32> to vector<8x128xf32>
    %162 = arith.mulf %13, %161 : vector<8x128xf32>
    %163 = arith.addf %158, %162 : vector<8x128xf32>
    %164 = arith.truncf %163 : vector<8x128xf32> to vector<8x128xbf16>
    %c0_78 = arith.constant 0 : index
    %c0_79 = arith.constant 0 : index
    %c512 = arith.constant 512 : index
    %165 = vector.load %arg4[%c0_78, %c0_79, %c512] : memref<1x128x896xbf16, #tpu.memory_space<vmem>>, vector<1x128x128xbf16>
    %166 = vector.shape_cast %165 : vector<1x128x128xbf16> to vector<128x128xbf16>
    %cst_80 = arith.constant dense<0.000000e+00> : vector<8x128xf32>
    %167 = tpu.matmul %164, %166, %cst_80 {dimension_numbers = #tpu.dot_dimension_numbers<[1], [0], [0], [1], [0, 0, 1, 1], [], []>} : vector<8x128xbf16>, vector<128x128xbf16>, vector<8x128xf32> -> vector<8x128xf32>
    %168 = arith.negf %167 : vector<8x128xf32>
    %169 = math.exp %168 : vector<8x128xf32>
    %cst_81 = arith.constant 1.000000e+00 : f32
    %170 = vector.broadcast %cst_81 : f32 to vector<8x128xf32>
    %171 = arith.addf %170, %169 : vector<8x128xf32>
    %172 = arith.divf %170, %171 : vector<8x128xf32>
    %173 = arith.truncf %154 : vector<8x128xf32> to vector<8x128xbf16>
    %c0_82 = arith.constant 0 : index
    %c0_83 = arith.constant 0 : index
    %c640 = arith.constant 640 : index
    %174 = vector.load %arg4[%c0_82, %c0_83, %c640] : memref<1x128x896xbf16, #tpu.memory_space<vmem>>, vector<1x128x256xbf16>
    %175 = vector.shape_cast %174 : vector<1x128x256xbf16> to vector<128x256xbf16>
    %cst_84 = arith.constant dense<0.000000e+00> : vector<8x256xf32>
    %176 = tpu.matmul %173, %175, %cst_84 {dimension_numbers = #tpu.dot_dimension_numbers<[1], [0], [0], [1], [0, 0, 1, 1], [], []>} : vector<8x128xbf16>, vector<128x256xbf16>, vector<8x256xf32> -> vector<8x256xf32>
    %cst_85 = arith.constant 0.000000e+00 : f32
    %177 = vector.broadcast %cst_85 : f32 to vector<8x256xf32>
    %178 = arith.maximumf %176, %177 : vector<8x256xf32>
    %179 = arith.mulf %178, %178 : vector<8x256xf32>
    %180 = arith.truncf %179 : vector<8x256xf32> to vector<8x256xbf16>
    %c0_86 = arith.constant 0 : index
    %c0_87 = arith.constant 0 : index
    %c0_88 = arith.constant 0 : index
    %181 = vector.load %arg5[%c0_86, %c0_87, %c0_88] : memref<1x256x128xbf16, #tpu.memory_space<vmem>>, vector<1x256x128xbf16>
    %182 = vector.shape_cast %181 : vector<1x256x128xbf16> to vector<256x128xbf16>
    %cst_89 = arith.constant dense<0.000000e+00> : vector<8x128xf32>
    %183 = tpu.matmul %180, %182, %cst_89 {dimension_numbers = #tpu.dot_dimension_numbers<[1], [0], [0], [1], [0, 0, 1, 1], [], []>} : vector<8x256xbf16>, vector<256x128xbf16>, vector<8x128xf32> -> vector<8x128xf32>
    %184 = arith.mulf %172, %183 : vector<8x128xf32>
    %185 = arith.addf %119, %184 : vector<8x128xf32>
    %c0_90 = arith.constant 0 : index
    %c0_91 = arith.constant 0 : index
    %186 = vector.load %arg7[%c0_90, %c0_91] : memref<8x128xf32, #tpu.memory_space<vmem>>, vector<8x128xf32>
    tpu.vector_store %arg7[%c0_90, %c0_91], %185 {strides = array<i32>} : memref<8x128xf32, #tpu.memory_space<vmem>>, vector<8x128xf32>,
    %c0_92 = arith.constant 0 : index
    %c0_93 = arith.constant 0 : index
    %c0_94 = arith.constant 0 : index
    %c0_95 = arith.constant 0 : index
    %187 = vector.load %arg8[%c0_92, %c0_93, %c0_94, %c0_95] : memref<5x1x8x128xf32, #tpu.memory_space<vmem>>, vector<1x1x8x128xf32>
    %188 = vector.shape_cast %187 : vector<1x1x8x128xf32> to vector<8x128xf32>
    %189 = vector.shape_cast %109 : vector<8x128xf32> to vector<1x1x8x128xf32>
    tpu.vector_store %arg8[%c0_92, %c0_93, %c0_94, %c0_95], %189 {strides = array<i32>} : memref<5x1x8x128xf32, #tpu.memory_space<vmem>>, vector<1x1x8x128xf32>,
    %c1_96 = arith.constant 1 : index
    %c0_97 = arith.constant 0 : index
    %c0_98 = arith.constant 0 : index
    %c0_99 = arith.constant 0 : index
    %190 = vector.load %arg8[%c1_96, %c0_97, %c0_98, %c0_99] : memref<5x1x8x128xf32, #tpu.memory_space<vmem>>, vector<1x1x8x128xf32>
    %191 = vector.shape_cast %190 : vector<1x1x8x128xf32> to vector<8x128xf32>
    %192 = vector.shape_cast %111 : vector<8x128xf32> to vector<1x1x8x128xf32>
    tpu.vector_store %arg8[%c1_96, %c0_97, %c0_98, %c0_99], %192 {strides = array<i32>} : memref<5x1x8x128xf32, #tpu.memory_space<vmem>>, vector<1x1x8x128xf32>,
    %c2_100 = arith.constant 2 : index
    %c0_101 = arith.constant 0 : index
    %c0_102 = arith.constant 0 : index
    %c0_103 = arith.constant 0 : index
    %193 = vector.load %arg8[%c2_100, %c0_101, %c0_102, %c0_103] : memref<5x1x8x128xf32, #tpu.memory_space<vmem>>, vector<1x1x8x128xf32>
    %194 = vector.shape_cast %193 : vector<1x1x8x128xf32> to vector<8x128xf32>
    %195 = vector.shape_cast %102 : vector<8x128xf32> to vector<1x1x8x128xf32>
    tpu.vector_store %arg8[%c2_100, %c0_101, %c0_102, %c0_103], %195 {strides = array<i32>} : memref<5x1x8x128xf32, #tpu.memory_space<vmem>>, vector<1x1x8x128xf32>,
    %c3_104 = arith.constant 3 : index
    %c0_105 = arith.constant 0 : index
    %c0_106 = arith.constant 0 : index
    %c0_107 = arith.constant 0 : index
    %196 = vector.load %arg8[%c3_104, %c0_105, %c0_106, %c0_107] : memref<5x1x8x128xf32, #tpu.memory_space<vmem>>, vector<1x1x8x128xf32>
    %197 = vector.shape_cast %196 : vector<1x1x8x128xf32> to vector<8x128xf32>
    %198 = vector.shape_cast %39 : vector<8x128xf32> to vector<1x1x8x128xf32>
    tpu.vector_store %arg8[%c3_104, %c0_105, %c0_106, %c0_107], %198 {strides = array<i32>} : memref<5x1x8x128xf32, #tpu.memory_space<vmem>>, vector<1x1x8x128xf32>,
    %c4_108 = arith.constant 4 : index
    %c0_109 = arith.constant 0 : index
    %c0_110 = arith.constant 0 : index
    %c0_111 = arith.constant 0 : index
    %199 = vector.load %arg8[%c4_108, %c0_109, %c0_110, %c0_111] : memref<5x1x8x128xf32, #tpu.memory_space<vmem>>, vector<1x1x8x128xf32>
    %200 = vector.shape_cast %199 : vector<1x1x8x128xf32> to vector<8x128xf32>
    %201 = vector.shape_cast %145 : vector<8x128xf32> to vector<1x1x8x128xf32>
    tpu.vector_store %arg8[%c4_108, %c0_109, %c0_110, %c0_111], %201 {strides = array<i32>} : memref<5x1x8x128xf32, #tpu.memory_space<vmem>>, vector<1x1x8x128xf32>,
    return
  }
  func.func @transform_0(%arg0: i32) -> (i32, i32) {
    %c0_i32 = arith.constant 0 : i32
    %c0_i32_0 = arith.constant 0 : i32
    %c0_i32_1 = arith.constant 0 : i32
    return %c0_i32, %c0_i32_0 : i32, i32
  }
  func.func @transform_1(%arg0: i32) -> (i32, i32) {
    %c0_i32 = arith.constant 0 : i32
    %c0_i32_0 = arith.constant 0 : i32
    %c0_i32_1 = arith.constant 0 : i32
    return %c0_i32, %c0_i32_0 : i32, i32
  }
  func.func @transform_2(%arg0: i32) -> (i32, i32, i32) {
    %c0_i32 = arith.constant 0 : i32
    %c0_i32_0 = arith.constant 0 : i32
    %c0_i32_1 = arith.constant 0 : i32
    return %arg0, %c0_i32, %c0_i32_0 : i32, i32, i32
  }
  func.func @transform_3(%arg0: i32) -> (i32, i32, i32) {
    %c0_i32 = arith.constant 0 : i32
    %c0_i32_0 = arith.constant 0 : i32
    %c0_i32_1 = arith.constant 0 : i32
    return %arg0, %c0_i32, %c0_i32_0 : i32, i32, i32
  }
  func.func @transform_4(%arg0: i32) -> (i32, i32, i32) {
    %c0_i32 = arith.constant 0 : i32
    %c0_i32_0 = arith.constant 0 : i32
    %c0_i32_1 = arith.constant 0 : i32
    return %arg0, %c0_i32, %c0_i32_0 : i32, i32, i32
  }
  func.func @transform_5(%arg0: i32) -> (i32, i32, i32, i32) {
    %c0_i32 = arith.constant 0 : i32
    %c0_i32_0 = arith.constant 0 : i32
    %c0_i32_1 = arith.constant 0 : i32
    %c0_i32_2 = arith.constant 0 : i32
    return %c0_i32, %arg0, %c0_i32_0, %c0_i32_1 : i32, i32, i32, i32
  }
  func.func @transform_6(%arg0: i32) -> (i32, i32) {
    %c0_i32 = arith.constant 0 : i32
    %c0_i32_0 = arith.constant 0 : i32
    %c0_i32_1 = arith.constant 0 : i32
    return %c0_i32, %c0_i32_0 : i32, i32
  }
  func.func @transform_7(%arg0: i32) -> (i32, i32, i32, i32) {
    %c0_i32 = arith.constant 0 : i32
    %c0_i32_0 = arith.constant 0 : i32
    %c0_i32_1 = arith.constant 0 : i32
    %c0_i32_2 = arith.constant 0 : i32
    return %c0_i32, %arg0, %c0_i32_0, %c0_i32_1 : i32, i32, i32, i32
  }
}

</mosaic_0001>

<llo_original>
// kernel: tpu_custom_call.1
$region0: #{tpu_custom_call.1}
  #allocation0 [shape = 'u32[]', space=smem, size = 0x4, offset = 0x4, fixed_abs, tag = 'smem constant byte address 0x4 - core index']
  #allocation1 [shape = 'u32[144,128]{1,0:T(1,128)}', space=vmem, size = 0x12000, scoped, tag = 'internal scratch']
  %s0 = inlined_call_operand.vmem [shape: f32[8,128], index: 0, kind: input, shape index: {}]
  %s1 = inlined_call_operand.vmem [shape: f32[2,128], index: 1, kind: input, shape index: {}]
  %s2 = inlined_call_operand.vmem [shape: f32[2,16,128], index: 2, kind: input, shape index: {}]
  %s3 = inlined_call_operand.hbm [shape: bf16[2,128,896], index: 3, kind: input, shape index: {}]
  %s4 = inlined_call_operand.hbm [shape: bf16[2,256,128], index: 4, kind: input, shape index: {}]
  %s5 = inlined_call_operand.hbm [shape: f32[5,2,8,128], index: 5, kind: input, shape index: {}, may-alias: {5,7}]
  %s6 = inlined_call_operand.hbm [shape: f32[8,128], index: 6, kind: output, shape index: {0}]
  %s7 = inlined_call_operand.hbm [shape: f32[5,2,8,128], index: 7, kind: output, shape index: {1}, may-alias: {5,7}]
  %8 = xla_tuple %s6, %s7
  %s9 = sld [smem:[#allocation0]]
  $region81: #{tpu_custom_call.1} parent=0
    _
  %s11 = ssub.s32 1, %s9
  %s12 = scalar_select 0, %s11, %s9
  $region1: #{tpu_custom_call.1} parent=0
    #allocation2 [shape = 'u8[458752]{0}', space=vmem, size = 0x70000, scoped, tag = 'input window, operand 3']
    #allocation3 [shape = 's32[2]{0}', space=sflag, size = 0x8, scoped, tag = 'scoped memory for tpu_custom_call.1']
    #allocation4 [shape = 's32[2]{0}', space=sflag, size = 0x8, scoped, tag = 'scoped memory for tpu_custom_call.1']
    #allocation5 [shape = 'u8[131072]{0}', space=vmem, size = 0x20000, scoped, tag = 'input window, operand 4']
    #allocation6 [shape = 's32[2]{0}', space=sflag, size = 0x8, scoped, tag = 'scoped memory for tpu_custom_call.1']
    #allocation7 [shape = 'u8[40960]{0}', space=vmem, size = 0xa000, scoped, tag = 'input window, operand 5']
    #allocation8 [shape = 'u8[4096]{0}', space=vmem, size = 0x1000, scoped, tag = 'output window, operand 0, single buffered']
    #allocation9 [shape = 'u8[40960]{0}', space=vmem, size = 0xa000, scoped, tag = 'output window, operand 1']
    #allocation10 [shape = 's32[2]{0}', space=sflag, size = 0x8, scoped, tag = 'scoped memory for tpu_custom_call.1']
    %13 = vsyncpa [#allocation3], 0
    %s14 = scalar_lea.sflag [#allocation3], 1
    %15 = vsyncpa %s14, 0
    %16 = vsyncpa [#allocation6], 0
    %s17 = scalar_lea.sflag [#allocation6], 1
    %18 = vsyncpa %s17, 0
    %19 = vsyncpa [#allocation4], 0
    %20 = vsyncpa [#allocation10], 0
    %s21 = scalar_lea.sflag [#allocation10], 1
    %22 = vsyncpa %s21, 0
    loop: start=0, step=1, limit=4
    $region2: #{tpu_custom_call.1} parent=1 // loop_pre_header
      _
    $region3: #{tpu_custom_call.1} parent=1 // loop_header
      %s24 = sphi 0, %s28
      %p25 = scmp.ge.s32.totalorder %s24, 4
      %s32 = sphi 0, %s32
      %s34 = sphi 0, %s32
      %s35 = sphi 0, %s34
      %s49 = sphi 0, %s35
      %s53 = sphi 0, %s53
      %s55 = sphi 0, %s53
      %s56 = sphi 0, %s55
      %s70 = sphi 0, %s56
      %s76 = sphi 0, %s78
      %s79 = sphi 0, %s76
      %s80 = sphi 0, %s79
      %s96 = sphi 0, %s80
      %s102 = sphi 0, %s104
      %s105 = sphi 0, %s102
      %s106 = sphi 0, %s105
      %s122 = sphi 0, %s106
      %s128 = sphi 0, %s130
      %s131 = sphi 0, %s128
      %s132 = sphi 0, %s131
      %s148 = sphi 0, %s132
      %s154 = sphi 0, %s156
      %s157 = sphi 0, %s154
      %s158 = sphi 0, %s157
      %s174 = sphi 0, %s158
      %s178 = sphi 0, %s178
      %s180 = sphi 0, %s178
      %s181 = sphi 0, %s180
      %s195 = sphi 0, %s181
      %s201 = sphi 0, %s203
      %s204 = sphi 0, %s201
      %s205 = sphi 0, %s204
      %s221 = sphi 0, %s205
    $region4: #{tpu_custom_call.1} parent=1 // loop_header_branch
      %27 = sbr.rel (%p25) target = $region8
    $region5: #{tpu_custom_call.1} parent=1 // loop_body
      %s29 = ssub.s32 %s24, 1
      %s30 = ssub.s32 %s24, 2
      %s31 = sadd.s32 %s24, 1
      %s33 = sadd.s32 %s32, 1
      %p36 = scmp.eq.s32.totalorder %s24, 1
      %p37 = scmp.ne.s32.totalorder %s32, %s34
      %p38 = scmp.eq.s32.totalorder %s24, 0
      %p39 = por %p37, %p38
      %p40 = scmp.ne.s32.totalorder %s32, %s34
      %p41 = scmp.eq.s32.totalorder %s29, 1
      %p42 = por %p40, %p41
      %p43 = scmp.ne.s32.totalorder %s34, %s35
      %p44 = scmp.eq.s32.totalorder %s29, 0
      %p45 = por %p43, %p44
      %p46 = scmp.ne.s32.totalorder %s34, %s35
      %p47 = scmp.eq.s32.totalorder %s30, 1
      %p48 = por %p46, %p47
      %p50 = scmp.ne.s32.totalorder %s35, %s49
      %p51 = scmp.eq.s32.totalorder %s30, 0
      %p52 = por %p50, %p51
      %s54 = sadd.s32 %s53, 1
      %p57 = scmp.eq.s32.totalorder %s24, 1
      %p58 = scmp.ne.s32.totalorder %s53, %s55
      %p59 = scmp.eq.s32.totalorder %s24, 0
      %p60 = por %p58, %p59
      %p61 = scmp.ne.s32.totalorder %s53, %s55
      %p62 = scmp.eq.s32.totalorder %s29, 1
      %p63 = por %p61, %p62
      %p64 = scmp.ne.s32.totalorder %s55, %s56
      %p65 = scmp.eq.s32.totalorder %s29, 0
      %p66 = por %p64, %p65
      %p67 = scmp.ne.s32.totalorder %s55, %s56
      %p68 = scmp.eq.s32.totalorder %s30, 1
      %p69 = por %p67, %p68
      %p71 = scmp.ne.s32.totalorder %s56, %s70
      %p72 = scmp.eq.s32.totalorder %s30, 0
      %p73 = por %p71, %p72
      %s74 = ssub.s32 %s24, %s31
      %p75 = scmp.eq.s32.totalorder %s74, 0
      %s77 = sadd.s32 %s76, 1
      %s78 = scalar_select %p75, %s76, %s77
      %p81 = pneg %p75
      %p82 = scmp.eq.s32.totalorder %s24, 1
      %p83 = por %p81, %p82
      %p84 = scmp.ne.s32.totalorder %s76, %s79
      %p85 = scmp.eq.s32.totalorder %s24, 0
      %p86 = por %p84, %p85
      %p87 = scmp.ne.s32.totalorder %s76, %s79
      %p88 = scmp.eq.s32.totalorder %s29, 1
      %p89 = por %p87, %p88
      %p90 = scmp.ne.s32.totalorder %s79, %s80
      %p91 = scmp.eq.s32.totalorder %s29, 0
      %p92 = por %p90, %p91
      %p93 = scmp.ne.s32.totalorder %s79, %s80
      %p94 = scmp.eq.s32.totalorder %s30, 1
      %p95 = por %p93, %p94
      %p97 = scmp.ne.s32.totalorder %s80, %s96
      %p98 = scmp.eq.s32.totalorder %s30, 0
      %p99 = por %p97, %p98
      %s100 = ssub.s32 %s24, %s31
      %p101 = scmp.eq.s32.totalorder %s100, 0
      %s103 = sadd.s32 %s102, 1
      %s104 = scalar_select %p101, %s102, %s103
      %p107 = pneg %p101
      %p108 = scmp.eq.s32.totalorder %s24, 1
      %p109 = por %p107, %p108
      %p110 = scmp.ne.s32.totalorder %s102, %s105
      %p111 = scmp.eq.s32.totalorder %s24, 0
      %p112 = por %p110, %p111
      %p113 = scmp.ne.s32.totalorder %s102, %s105
      %p114 = scmp.eq.s32.totalorder %s29, 1
      %p115 = por %p113, %p114
      %p116 = scmp.ne.s32.totalorder %s105, %s106
      %p117 = scmp.eq.s32.totalorder %s29, 0
      %p118 = por %p116, %p117
      %p119 = scmp.ne.s32.totalorder %s105, %s106
      %p120 = scmp.eq.s32.totalorder %s30, 1
      %p121 = por %p119, %p120
      %p123 = scmp.ne.s32.totalorder %s106, %s122
      %p124 = scmp.eq.s32.totalorder %s30, 0
      %p125 = por %p123, %p124
      %s126 = ssub.s32 %s24, %s31
      %p127 = scmp.eq.s32.totalorder %s126, 0
      %s129 = sadd.s32 %s128, 1
      %s130 = scalar_select %p127, %s128, %s129
      %p133 = pneg %p127
      %p134 = scmp.eq.s32.totalorder %s24, 1
      %p135 = por %p133, %p134
      %p136 = scmp.ne.s32.totalorder %s128, %s131
      %p137 = scmp.eq.s32.totalorder %s24, 0
      %p138 = por %p136, %p137
      %p139 = scmp.ne.s32.totalorder %s128, %s131
      %p140 = scmp.eq.s32.totalorder %s29, 1
      %p141 = por %p139, %p140
      %p142 = scmp.ne.s32.totalorder %s131, %s132
      %p143 = scmp.eq.s32.totalorder %s29, 0
      %p144 = por %p142, %p143
      %p145 = scmp.ne.s32.totalorder %s131, %s132
      %p146 = scmp.eq.s32.totalorder %s30, 1
      %p147 = por %p145, %p146
      %p149 = scmp.ne.s32.totalorder %s132, %s148
      %p150 = scmp.eq.s32.totalorder %s30, 0
      %p151 = por %p149, %p150
      %s152 = ssub.s32 %s24, %s31
      %p153 = scmp.eq.s32.totalorder %s152, 0
      %s155 = sadd.s32 %s154, 1
      %s156 = scalar_select %p153, %s154, %s155
      %p159 = pneg %p153
      %p160 = scmp.eq.s32.totalorder %s24, 1
      %p161 = por %p159, %p160
      %p162 = scmp.ne.s32.totalorder %s154, %s157
      %p163 = scmp.eq.s32.totalorder %s24, 0
      %p164 = por %p162, %p163
      %p165 = scmp.ne.s32.totalorder %s154, %s157
      %p166 = scmp.eq.s32.totalorder %s29, 1
      %p167 = por %p165, %p166
      %p168 = scmp.ne.s32.totalorder %s157, %s158
      %p169 = scmp.eq.s32.totalorder %s29, 0
      %p170 = por %p168, %p169
      %p171 = scmp.ne.s32.totalorder %s157, %s158
      %p172 = scmp.eq.s32.totalorder %s30, 1
      %p173 = por %p171, %p172
      %p175 = scmp.ne.s32.totalorder %s158, %s174
      %p176 = scmp.eq.s32.totalorder %s30, 0
      %p177 = por %p175, %p176
      %s179 = sadd.s32 %s178, 1
      %p182 = scmp.eq.s32.totalorder %s24, 1
      %p183 = scmp.ne.s32.totalorder %s178, %s180
      %p184 = scmp.eq.s32.totalorder %s24, 0
      %p185 = por %p183, %p184
      %p186 = scmp.ne.s32.totalorder %s178, %s180
      %p187 = scmp.eq.s32.totalorder %s29, 1
      %p188 = por %p186, %p187
      %p189 = scmp.ne.s32.totalorder %s180, %s181
      %p190 = scmp.eq.s32.totalorder %s29, 0
      %p191 = por %p189, %p190
      %p192 = scmp.ne.s32.totalorder %s180, %s181
      %p193 = scmp.eq.s32.totalorder %s30, 1
      %p194 = por %p192, %p193
      %p196 = scmp.ne.s32.totalorder %s181, %s195
      %p197 = scmp.eq.s32.totalorder %s30, 0
      %p198 = por %p196, %p197
      %s199 = ssub.s32 %s24, %s31
      %p200 = scmp.eq.s32.totalorder %s199, 0
      %s202 = sadd.s32 %s201, 1
      %s203 = scalar_select %p200, %s201, %s202
      %p206 = pneg %p200
      %p207 = scmp.eq.s32.totalorder %s24, 1
      %p208 = por %p206, %p207
      %p209 = scmp.ne.s32.totalorder %s201, %s204
      %p210 = scmp.eq.s32.totalorder %s24, 0
      %p211 = por %p209, %p210
      %p212 = scmp.ne.s32.totalorder %s201, %s204
      %p213 = scmp.eq.s32.totalorder %s29, 1
      %p214 = por %p212, %p213
      %p215 = scmp.ne.s32.totalorder %s204, %s205
      %p216 = scmp.eq.s32.totalorder %s29, 0
      %p217 = por %p215, %p216
      %p218 = scmp.ne.s32.totalorder %s204, %s205
      %p219 = scmp.eq.s32.totalorder %s30, 1
      %p220 = por %p218, %p219
      %p222 = scmp.ne.s32.totalorder %s205, %s221
      %p223 = scmp.eq.s32.totalorder %s30, 0
      %p224 = por %p222, %p223
      %p225 = scmp.le.s32.totalorder 1, %s24
      %p226 = scmp.lt.s32.totalorder %s24, 3
      %p227 = pnand %p225, %p226
      %p228 = pneg %p227
      // Predicated region
      $region9: #{tpu_custom_call.1} parent=5 // pred_check
        _
      $region10: #{tpu_custom_call.1} parent=5 // pred_check_branch
        %230 = sbr.rel (%p227) target = $region12
      $region11: #{tpu_custom_call.1} parent=5 // pred_region
        %s231 = ssub.s32 %s24, 1
        // Predicated region
        $region13: #{tpu_custom_call.1} parent=11 // pred_check
          %p232 = pneg %p45
        $region14: #{tpu_custom_call.1} parent=11 // pred_check_branch
          %234 = sbr.rel (%p232) target = $region16
        $region15: #{tpu_custom_call.1} parent=11 // pred_region
          _
        $region16: #{tpu_custom_call.1} parent=11 // pred_fallthru
          _
        // Predicated region
        $region17: #{tpu_custom_call.1} parent=11 // pred_check
          %p235 = pneg %p66
        $region18: #{tpu_custom_call.1} parent=11 // pred_check_branch
          %237 = sbr.rel (%p235) target = $region20
        $region19: #{tpu_custom_call.1} parent=11 // pred_region
          _
        $region20: #{tpu_custom_call.1} parent=11 // pred_fallthru
          _
      $region12: #{tpu_custom_call.1} parent=5 // pred_fallthru
        _
      %p238 = scmp.lt.s32.totalorder %s24, 2
      // Predicated region
      $region21: #{tpu_custom_call.1} parent=5 // pred_check
        %p239 = pneg %p238
      $region22: #{tpu_custom_call.1} parent=5 // pred_check_branch
        %241 = sbr.rel (%p239) target = $region24
      $region23: #{tpu_custom_call.1} parent=5 // pred_region
        // Predicated region
        $region25: #{tpu_custom_call.1} parent=23 // pred_check
          %p242 = pneg %p86
        $region26: #{tpu_custom_call.1} parent=23 // pred_check_branch
          %244 = sbr.rel (%p242) target = $region28
        $region27: #{tpu_custom_call.1} parent=23 // pred_region
          %p245 = scmp.lt.s32.totalorder %s24, 1
          %s246 = scalar_select %p245, %s24, 1
          %s247 = smul.addr %s246, 2
          %s248 = smul.addr %s247, 8
          %s249 = scalar_lea.vmem %s2, %s248
        $region28: #{tpu_custom_call.1} parent=23 // pred_fallthru
          _
        // Predicated region
        $region29: #{tpu_custom_call.1} parent=23 // pred_check
          %p250 = pneg %p112
        $region30: #{tpu_custom_call.1} parent=23 // pred_check_branch
          %252 = sbr.rel (%p250) target = $region32
        $region31: #{tpu_custom_call.1} parent=23 // pred_region
          %s253 = sand.u32 %s102, 1
          %s254 = scalar_lea.sflag [#allocation3], %s253
          %s255 = sand.u32 %s102, 1
          %s256 = smul.addr %s255, 448
          %s257 = scalar_lea.vmem [#allocation2], %s256
          %s259 = ssub.s32 7168, 7168
          %260 = vsyncadd %s254, %s259
          %s261 = smul.addr %s24, 112
          %s262 = smul.addr %s261, 64
          %s263 = scalar_lea.hbm %s3, %s262
          %s264 = sshll.u32 %s257, 4
          %s265 = int_to_ptr.vmem [resolvable:$true] %s264
          %270 = dma.hbm_to_vmem [thread:$0]  %s263, 7168, %s265, %s254, 448, 448, 28
        $region32: #{tpu_custom_call.1} parent=23 // pred_fallthru
          _
        // Predicated region
        $region33: #{tpu_custom_call.1} parent=23 // pred_check
          %p271 = pneg %p138
        $region34: #{tpu_custom_call.1} parent=23 // pred_check_branch
          %273 = sbr.rel (%p271) target = $region36
        $region35: #{tpu_custom_call.1} parent=23 // pred_region
          %s274 = sand.u32 %s24, 1
          %s275 = scalar_lea.sflag [#allocation6], %s274
          %s276 = sand.u32 %s128, 1
          %s277 = smul.addr %s276, 128
          %s278 = scalar_lea.vmem [#allocation5], %s277
          %s280 = ssub.s32 2048, 2048
          %281 = vsyncadd %s275, %s280
          %s282 = smul.addr %s24, 32
          %s283 = smul.addr %s282, 64
          %s284 = scalar_lea.hbm %s4, %s283
          %s285 = sshll.u32 %s278, 4
          %s286 = int_to_ptr.vmem [resolvable:$true] %s285
          %291 = dma.hbm_to_vmem [thread:$0]  %s284, 2048, %s286, %s275, 64, 64, 4
        $region36: #{tpu_custom_call.1} parent=23 // pred_fallthru
          _
        // Predicated region
        $region37: #{tpu_custom_call.1} parent=23 // pred_check
          %p292 = pneg %p164
        $region38: #{tpu_custom_call.1} parent=23 // pred_check_branch
          %294 = sbr.rel (%p292) target = $region40
        $region39: #{tpu_custom_call.1} parent=23 // pred_region
          %s295 = sand.u32 %s24, 1
          %s296 = scalar_lea.sflag [#allocation6], %s295
          %s297 = sand.u32 %s154, 1
          %s298 = smul.addr %s297, 40
          %s299 = scalar_lea.vmem [#allocation7], %s298
          %s301 = ssub.s32 640, 640
          %302 = vsyncadd %s296, %s301
          %s303 = smul.addr %s24, 128
          %s304 = scalar_lea.hbm %s5, %s303
          %s305 = sshll.u32 %s299, 4
          %s306 = int_to_ptr.vmem [resolvable:$true] %s305
          %311 = dma.hbm_to_vmem [thread:$0]  %s304, 640, %s306, %s296, 256, 128, 8
        $region40: #{tpu_custom_call.1} parent=23 // pred_fallthru
          _
      $region24: #{tpu_custom_call.1} parent=5 // pred_fallthru
        _
      %p312 = scmp.le.s32.totalorder 1, %s24
      %p313 = scmp.lt.s32.totalorder %s24, 3
      %p314 = pnand %p312, %p313
      %p315 = pneg %p314
      // Predicated region
      $region41: #{tpu_custom_call.1} parent=5 // pred_check
        _
      $region42: #{tpu_custom_call.1} parent=5 // pred_check_branch
        %317 = sbr.rel (%p314) target = $region44
      $region43: #{tpu_custom_call.1} parent=5 // pred_region
        %s318 = ssub.s32 %s24, 1
        %s319 = sand.u32 %s105, 1
        %s320 = scalar_lea.sflag [#allocation3], %s319
        %s321 = sand.u32 %s105, 1
        %s322 = smul.addr %s321, 448
        %s323 = scalar_lea.vmem [#allocation2], %s322
        // Predicated region
        $region45: #{tpu_custom_call.1} parent=43 // pred_check
          %p324 = pneg %p118
        $region46: #{tpu_custom_call.1} parent=43 // pred_check_branch
          %326 = sbr.rel (%p324) target = $region48
        $region47: #{tpu_custom_call.1} parent=43 // pred_region
          %327 = dma.done %s320, 7168
        $region48: #{tpu_custom_call.1} parent=43 // pred_fallthru
          _
        %s328 = sand.u32 %s29, 1
        %s329 = scalar_lea.sflag [#allocation6], %s328
        %s330 = sand.u32 %s131, 1
        %s331 = smul.addr %s330, 128
        %s332 = scalar_lea.vmem [#allocation5], %s331
        // Predicated region
        $region49: #{tpu_custom_call.1} parent=43 // pred_check
          %p333 = pneg %p144
        $region50: #{tpu_custom_call.1} parent=43 // pred_check_branch
          %335 = sbr.rel (%p333) target = $region52
        $region51: #{tpu_custom_call.1} parent=43 // pred_region
          %336 = dma.done %s329, 2048
        $region52: #{tpu_custom_call.1} parent=43 // pred_fallthru
          _
        %s337 = sand.u32 %s29, 1
        %s338 = scalar_lea.sflag [#allocation6], %s337
        %s339 = sand.u32 %s157, 1
        %s340 = smul.addr %s339, 40
        %s341 = scalar_lea.vmem [#allocation7], %s340
        // Predicated region
        $region53: #{tpu_custom_call.1} parent=43 // pred_check
          %p342 = pneg %p170
        $region54: #{tpu_custom_call.1} parent=43 // pred_check_branch
          %344 = sbr.rel (%p342) target = $region56
        $region55: #{tpu_custom_call.1} parent=43 // pred_region
          %345 = dma.done %s338, 640
        $region56: #{tpu_custom_call.1} parent=43 // pred_fallthru
          _
        %p346 = pneg %p45
        %p347 = pneg %p42
        %p348 = pneg %p66
        %p349 = pneg %p63
        %p350 = scmp.lt.s32.totalorder %s29, 1
        %s351 = scalar_select %p350, %s29, 1
        %s352 = smul.addr %s351, 2
        %s353 = smul.addr %s352, 8
        %s354 = scalar_lea.vmem %s2, %s353
        %p355 = pneg %p92
        %p356 = pneg %p89
        %s357 = sand.u32 %s105, 1
        %s358 = scalar_lea.sflag [#allocation3], %s357
        %s359 = sand.u32 %s105, 1
        %s360 = smul.addr %s359, 448
        %s361 = scalar_lea.vmem [#allocation2], %s360
        %p362 = pneg %p118
        %p363 = pneg %p115
        %s364 = sand.u32 %s29, 1
        %s365 = scalar_lea.sflag [#allocation6], %s364
        %s366 = sand.u32 %s131, 1
        %s367 = smul.addr %s366, 128
        %s368 = scalar_lea.vmem [#allocation5], %s367
        %p369 = pneg %p144
        %p370 = pneg %p141
        %s371 = sand.u32 %s29, 1
        %s372 = scalar_lea.sflag [#allocation6], %s371
        %s373 = sand.u32 %s157, 1
        %s374 = smul.addr %s373, 40
        %s375 = scalar_lea.vmem [#allocation7], %s374
        %p376 = pneg %p170
        %p377 = pneg %p167
        %p378 = pneg %p191
        %p379 = pneg %p188
        %p380 = pneg %p217
        %p381 = pneg %p214
        %s382 = sand.u32 %s204, 1
        %s383 = scalar_lea.sflag [#allocation10], %s382
        %s384 = sand.u32 %s204, 1
        %s385 = smul.addr %s384, 40
        %s386 = scalar_lea.vmem [#allocation9], %s385
        %p387 = scmp.lt.s32.totalorder %s29, 1
        %s388 = scalar_select %p387, %s29, 1
        %s389 = smul.addr %s388, 2
        %s390 = smul.addr %s389, 8
        %s391 = scalar_lea.vmem %s2, %s390
        %p393 = scmp.eq.s32.totalorder %s29, 0
        // Predicated region
        $region57: #{tpu_custom_call.1} parent=43 // pred_check
          %p394 = pneg %p393
        $region58: #{tpu_custom_call.1} parent=43 // pred_check_branch
          %396 = sbr.rel (%p394) target = $region60
        $region59: #{tpu_custom_call.1} parent=43 // pred_region
          %v397 = vld [vmem:[%s0] sm:$0xff]
          %v398 = vld [vmem:[%s1] sm:$0x1]
          %v399 = vld [vmem:[%s1 + $0x1] sm:$0x1]
          %400 = vadd.xlane.f32.xlu0 %v397
          %v401 = vpop.xlane.xlu0 %400
          %v402 = vrcp.pop 128.0
          %v403 = vmul.f32 %v401, %v402
          %v404 = vsub.f32 %v397, %v403
          %v405 = vmul.f32 %v404, %v404
          %406 = vadd.xlane.f32.xlu0 %v405
          %v407 = vpop.xlane.xlu0 %406
          %v408 = vmul.f32 %v407, %v402
          %v409 = vadd.f32 %v408, 1e-05
          %v410 = vrsqrt.pop %v409
          %v411 = vmul.f32 %v404, %v410
          %v412 = vlaneseq
          %v413 = vshrl.u32 %v412, 7
          %v414 = vsub.s32 0, %v413
          %v415 = vrot.slane %v398, %v414
          %v416 = vmul.f32 %v411, %v415
          %v417 = vlaneseq
          %v418 = vshrl.u32 %v417, 7
          %v419 = vsub.s32 0, %v418
          %v420 = vrot.slane %v399, %v419
          %v421 = vadd.f32 %v416, %v420
          %422 = vst [vmem:[#allocation8] sm:$0xff] %v421
        $region60: #{tpu_custom_call.1} parent=43 // pred_fallthru
          _
        %v423 = vld [vmem:[#allocation8] sm:$0xff]
        %v424 = vld [vmem:[%s341] sm:$0xff]
        %s425 = scalar_lea.vmem %s341, 8 [#allocation7]
        %v426 = vld [vmem:[%s425] sm:$0xff]
        %s427 = scalar_lea.vmem %s341, 16 [#allocation7]
        %v428 = vld [vmem:[%s427] sm:$0xff]
        %s429 = scalar_lea.vmem %s341, 24 [#allocation7]
        %v430 = vld [vmem:[%s429] sm:$0xff]
        %s431 = scalar_lea.vmem %s341, 32 [#allocation7]
        %v432 = vld [vmem:[%s431] sm:$0xff]
        %v433 = vld [vmem:[%s391] sm:$0x1]
        %v434 = vld [vmem:[%s391 + $0x1] sm:$0x1]
        %435 = vadd.xlane.f32.xlu0 %v423
        %v436 = vpop.xlane.xlu0 %435
        %v437 = vrcp.pop 128.0
        %v438 = vmul.f32 %v436, %v437
        %v439 = vsub.f32 %v423, %v438
        %v440 = vmul.f32 %v439, %v439
        %441 = vadd.xlane.f32.xlu0 %v440
        %v442 = vpop.xlane.xlu0 %441
        %v443 = vmul.f32 %v442, %v437
        %v444 = vadd.f32 %v443, 1e-05
        %v445 = vrsqrt.pop %v444
        %v446 = vmul.f32 %v439, %v445
        %v447 = vlaneseq
        %v448 = vshrl.u32 %v447, 7
        %v449 = vsub.s32 0, %v448
        %v450 = vrot.slane %v433, %v449
        %v451 = vmul.f32 %v446, %v450
        %v452 = vlaneseq
        %v453 = vshrl.u32 %v452, 7
        %v454 = vsub.s32 0, %v453
        %v455 = vrot.slane %v434, %v454
        %v456 = vadd.f32 %v451, %v455
        %v457 = vld [vmem:[%s391 + $0x6] sm:$0x1]
        %v458 = vlaneseq
        %v459 = vshrl.u32 %v458, 7
        %v460 = vsub.s32 0, %v459
        %v461 = vrot.slane %v457, %v460
        %v462 = vmul.f32 %v456, %v461
        %v463 = vld [vmem:[%s391 + $0x7] sm:$0x1]
        %v464 = vlaneseq
        %v465 = vshrl.u32 %v464, 7
        %v466 = vsub.s32 0, %v465
        %v467 = vrot.slane %v463, %v466
        %v468 = vmul.f32 %v430, %v467
        %v469 = vadd.f32 %v462, %v468
        %v470 = vld [vmem:[%s391 + $0x8] sm:$0x1]
        %v471 = vlaneseq
        %v472 = vshrl.u32 %v471, 7
        %v473 = vsub.s32 0, %v472
        %v474 = vrot.slane %v470, %v473
        %v475 = vmul.f32 %v456, %v474
        %v476 = vld [vmem:[%s391 + $0x9] sm:$0x1]
        %v477 = vlaneseq
        %v478 = vshrl.u32 %v477, 7
        %v479 = vsub.s32 0, %v478
        %v480 = vrot.slane %v476, %v479
        %v481 = vmul.f32 %v430, %v480
        %v482 = vadd.f32 %v475, %v481
        %v483 = vld [vmem:[%s391 + $0xa] sm:$0x1]
        %v484 = vlaneseq
        %v485 = vshrl.u32 %v484, 7
        %v486 = vsub.s32 0, %v485
        %v487 = vrot.slane %v483, %v486
        %v488 = vmul.f32 %v456, %v487
        %v489 = vld [vmem:[%s391 + $0xb] sm:$0x1]
        %v490 = vlaneseq
        %v491 = vshrl.u32 %v490, 7
        %v492 = vsub.s32 0, %v491
        %v493 = vrot.slane %v489, %v492
        %v494 = vmul.f32 %v430, %v493
        %v495 = vadd.f32 %v488, %v494
        %v496 = vpack.c.bf16 %v469, %v469
        %v497 = vld [vmem:[%s323] sm:$0xf]
        %v498 = vld [vmem:[%s323 + $0x1c] sm:$0xf]
        %v499 = vld [vmem:[%s323 + $0x38] sm:$0xf]
        %v500 = vld [vmem:[%s323 + $0x54] sm:$0xf]
        %v501 = vld [vmem:[%s323 + $0x70] sm:$0xf]
        %v502 = vld [vmem:[%s323 + $0x8c] sm:$0xf]
        %v503 = vld [vmem:[%s323 + $0xa8] sm:$0xf]
        %v504 = vld [vmem:[%s323 + $0xc4] sm:$0xf]
        %v505 = vld [vmem:[%s323 + $0xe0] sm:$0xf]
        %v506 = vld [vmem:[%s323 + $0xfc] sm:$0xf]
        %v507 = vld [vmem:[%s323 + $0x118] sm:$0xf]
        %v508 = vld [vmem:[%s323 + $0x134] sm:$0xf]
        %v509 = vld [vmem:[%s323 + $0x150] sm:$0xf]
        %v510 = vld [vmem:[%s323 + $0x16c] sm:$0xf]
        %v511 = vld [vmem:[%s323 + $0x188] sm:$0xf]
        %v512 = vld [vmem:[%s323 + $0x1a4] sm:$0xf]
        %v529 = vunpack.c.l.b16 %v497
        %v530 = vunpack.c.l.b16 %v498
        %v531 = vunpack.c.l.b16 %v499
        %v532 = vunpack.c.l.b16 %v500
        %v533 = vunpack.c.l.b16 %v501
        %v534 = vunpack.c.l.b16 %v502
        %v535 = vunpack.c.l.b16 %v503
        %v536 = vunpack.c.l.b16 %v504
        %v537 = vunpack.c.l.b16 %v505
        %v538 = vunpack.c.l.b16 %v506
        %v539 = vunpack.c.l.b16 %v507
        %v540 = vunpack.c.l.b16 %v508
        %v541 = vunpack.c.l.b16 %v509
        %v542 = vunpack.c.l.b16 %v510
        %v543 = vunpack.c.l.b16 %v511
        %v544 = vunpack.c.l.b16 %v512
        %v545 = vpack.c.b16 %v530, %v529
        %v546 = vpack.c.b16 %v532, %v531
        %v547 = vpack.c.b16 %v534, %v533
        %v548 = vpack.c.b16 %v536, %v535
        %v549 = vpack.c.b16 %v538, %v537
        %v550 = vpack.c.b16 %v540, %v539
        %v551 = vpack.c.b16 %v542, %v541
        %v552 = vpack.c.b16 %v544, %v543
        %561 = vmatprep.subr.bf16.mxu0 0
        %562 = vmatpush1.bf16.msra.mxu0 %v545
        %563 = vmatprep.subr.bf16.mxu0 0
        %564 = vmatpush1.bf16.msra.mxu0 %v546
        %565 = vmatprep.subr.bf16.mxu0 0
        %566 = vmatpush1.bf16.msra.mxu0 %v547
        %567 = vmatprep.subr.bf16.mxu0 0
        %568 = vmatpush1.bf16.msra.mxu0 %v548
        %569 = vmatprep.subr.bf16.mxu0 0
        %570 = vmatpush1.bf16.msra.mxu0 %v549
        %571 = vmatprep.subr.bf16.mxu0 0
        %572 = vmatpush1.bf16.msra.mxu0 %v550
        %573 = vmatprep.subr.bf16.mxu0 0
        %574 = vmatpush1.bf16.msra.mxu0 %v551
        %575 = vmatprep.subr.bf16.mxu0 0
        %576 = vmatpush1.bf16.msra.mxu0 %v552
        %577 = vmatprep.subr.bf16.mxu0 0
        %578 = vmatpush1.bf16.msra.mxu0 0
        %579 = vmatprep.subr.bf16.mxu0 0
        %580 = vmatpush1.bf16.msra.mxu0 0
        %581 = vmatprep.subr.bf16.mxu0 0
        %582 = vmatpush1.bf16.msra.mxu0 0
        %583 = vmatprep.subr.bf16.mxu0 0
        %584 = vmatpush1.bf16.msra.mxu0 0
        %585 = vmatprep.subr.bf16.mxu0 0
        %586 = vmatpush1.bf16.msra.mxu0 0
        %587 = vmatprep.subr.bf16.mxu0 0
        %588 = vmatpush1.bf16.msra.mxu0 0
        %589 = vmatprep.subr.bf16.mxu0 0
        %590 = vmatpush1.bf16.msra.mxu0 0
        %591 = vmatprep.subr.bf16.mxu0 0
        %592 = vmatpush1.bf16.msra.mxu0 0
        %593 = vmatprep.mubr.bf16.mxu0 0
        %594 = vmatmul.mubr.bf16.gmra.mrb[0].mxu0 %v496
        %v595 = vpop.f32.mrb[0].mxu0
        %v596 = vadd.f32 0.0, %v595
        %v597 = vpop.f32.mrb[0].mxu0
        %v598 = vpop.f32.mrb[0].mxu0
        %v599 = vpop.f32.mrb[0].mxu0
        %600 = vdwg.mxu0
        %v601 = vpack.c.bf16 %v482, %v482
        %v602 = vld [vmem:[%s323 + $0x4] sm:$0xf]
        %v603 = vld [vmem:[%s323 + $0x20] sm:$0xf]
        %v604 = vld [vmem:[%s323 + $0x3c] sm:$0xf]
        %v605 = vld [vmem:[%s323 + $0x58] sm:$0xf]
        %v606 = vld [vmem:[%s323 + $0x74] sm:$0xf]
        %v607 = vld [vmem:[%s323 + $0x90] sm:$0xf]
        %v608 = vld [vmem:[%s323 + $0xac] sm:$0xf]
        %v609 = vld [vmem:[%s323 + $0xc8] sm:$0xf]
        %v610 = vld [vmem:[%s323 + $0xe4] sm:$0xf]
        %v611 = vld [vmem:[%s323 + $0x100] sm:$0xf]
        %v612 = vld [vmem:[%s323 + $0x11c] sm:$0xf]
        %v613 = vld [vmem:[%s323 + $0x138] sm:$0xf]
        %v614 = vld [vmem:[%s323 + $0x154] sm:$0xf]
        %v615 = vld [vmem:[%s323 + $0x170] sm:$0xf]
        %v616 = vld [vmem:[%s323 + $0x18c] sm:$0xf]
        %v617 = vld [vmem:[%s323 + $0x1a8] sm:$0xf]
        %v634 = vunpack.c.l.b16 %v602
        %v635 = vunpack.c.l.b16 %v603
        %v636 = vunpack.c.l.b16 %v604
        %v637 = vunpack.c.l.b16 %v605
        %v638 = vunpack.c.l.b16 %v606
        %v639 = vunpack.c.l.b16 %v607
        %v640 = vunpack.c.l.b16 %v608
        %v641 = vunpack.c.l.b16 %v609
        %v642 = vunpack.c.l.b16 %v610
        %v643 = vunpack.c.l.b16 %v611
        %v644 = vunpack.c.l.b16 %v612
        %v645 = vunpack.c.l.b16 %v613
        %v646 = vunpack.c.l.b16 %v614
        %v647 = vunpack.c.l.b16 %v615
        %v648 = vunpack.c.l.b16 %v616
        %v649 = vunpack.c.l.b16 %v617
        %v650 = vpack.c.b16 %v635, %v634
        %v651 = vpack.c.b16 %v637, %v636
        %v652 = vpack.c.b16 %v639, %v638
        %v653 = vpack.c.b16 %v641, %v640
        %v654 = vpack.c.b16 %v643, %v642
        %v655 = vpack.c.b16 %v645, %v644
        %v656 = vpack.c.b16 %v647, %v646
        %v657 = vpack.c.b16 %v649, %v648
        %666 = vmatprep.subr.bf16.mxu0 0
        %667 = vmatpush1.bf16.msra.mxu0 %v650
        %668 = vmatprep.subr.bf16.mxu0 0
        %669 = vmatpush1.bf16.msra.mxu0 %v651
        %670 = vmatprep.subr.bf16.mxu0 0
        %671 = vmatpush1.bf16.msra.mxu0 %v652
        %672 = vmatprep.subr.bf16.mxu0 0
        %673 = vmatpush1.bf16.msra.mxu0 %v653
        %674 = vmatprep.subr.bf16.mxu0 0
        %675 = vmatpush1.bf16.msra.mxu0 %v654
        %676 = vmatprep.subr.bf16.mxu0 0
        %677 = vmatpush1.bf16.msra.mxu0 %v655
        %678 = vmatprep.subr.bf16.mxu0 0
        %679 = vmatpush1.bf16.msra.mxu0 %v656
        %680 = vmatprep.subr.bf16.mxu0 0
        %681 = vmatpush1.bf16.msra.mxu0 %v657
        %682 = vmatprep.subr.bf16.mxu0 0
        %683 = vmatpush1.bf16.msra.mxu0 0
        %684 = vmatprep.subr.bf16.mxu0 0
        %685 = vmatpush1.bf16.msra.mxu0 0
        %686 = vmatprep.subr.bf16.mxu0 0
        %687 = vmatpush1.bf16.msra.mxu0 0
        %688 = vmatprep.subr.bf16.mxu0 0
        %689 = vmatpush1.bf16.msra.mxu0 0
        %690 = vmatprep.subr.bf16.mxu0 0
        %691 = vmatpush1.bf16.msra.mxu0 0
        %692 = vmatprep.subr.bf16.mxu0 0
        %693 = vmatpush1.bf16.msra.mxu0 0
        %694 = vmatprep.subr.bf16.mxu0 0
        %695 = vmatpush1.bf16.msra.mxu0 0
        %696 = vmatprep.subr.bf16.mxu0 0
        %697 = vmatpush1.bf16.msra.mxu0 0
        %698 = vmatprep.mubr.bf16.mxu0 0
        %699 = vmatmul.mubr.bf16.gmra.mrb[0].mxu0 %v601
        %v700 = vpop.f32.mrb[0].mxu0
        %v701 = vadd.f32 0.0, %v700
        %v702 = vpop.f32.mrb[0].mxu0
        %v703 = vpop.f32.mrb[0].mxu0
        %v704 = vpop.f32.mrb[0].mxu0
        %705 = vdwg.mxu0
        %v706 = vpack.c.bf16 %v495, %v495
        %v707 = vld [vmem:[%s323 + $0x8] sm:$0xf]
        %v708 = vld [vmem:[%s323 + $0x24] sm:$0xf]
        %v709 = vld [vmem:[%s323 + $0x40] sm:$0xf]
        %v710 = vld [vmem:[%s323 + $0x5c] sm:$0xf]
        %v711 = vld [vmem:[%s323 + $0x78] sm:$0xf]
        %v712 = vld [vmem:[%s323 + $0x94] sm:$0xf]
        %v713 = vld [vmem:[%s323 + $0xb0] sm:$0xf]
        %v714 = vld [vmem:[%s323 + $0xcc] sm:$0xf]
        %v715 = vld [vmem:[%s323 + $0xe8] sm:$0xf]
        %v716 = vld [vmem:[%s323 + $0x104] sm:$0xf]
        %v717 = vld [vmem:[%s323 + $0x120] sm:$0xf]
        %v718 = vld [vmem:[%s323 + $0x13c] sm:$0xf]
        %v719 = vld [vmem:[%s323 + $0x158] sm:$0xf]
        %v720 = vld [vmem:[%s323 + $0x174] sm:$0xf]
        %v721 = vld [vmem:[%s323 + $0x190] sm:$0xf]
        %v722 = vld [vmem:[%s323 + $0x1ac] sm:$0xf]
        %v739 = vunpack.c.l.b16 %v707
        %v740 = vunpack.c.l.b16 %v708
        %v741 = vunpack.c.l.b16 %v709
        %v742 = vunpack.c.l.b16 %v710
        %v743 = vunpack.c.l.b16 %v711
        %v744 = vunpack.c.l.b16 %v712
        %v745 = vunpack.c.l.b16 %v713
        %v746 = vunpack.c.l.b16 %v714
        %v747 = vunpack.c.l.b16 %v715
        %v748 = vunpack.c.l.b16 %v716
        %v749 = vunpack.c.l.b16 %v717
        %v750 = vunpack.c.l.b16 %v718
        %v751 = vunpack.c.l.b16 %v719
        %v752 = vunpack.c.l.b16 %v720
        %v753 = vunpack.c.l.b16 %v721
        %v754 = vunpack.c.l.b16 %v722
        %v755 = vpack.c.b16 %v740, %v739
        %v756 = vpack.c.b16 %v742, %v741
        %v757 = vpack.c.b16 %v744, %v743
        %v758 = vpack.c.b16 %v746, %v745
        %v759 = vpack.c.b16 %v748, %v747
        %v760 = vpack.c.b16 %v750, %v749
        %v761 = vpack.c.b16 %v752, %v751
        %v762 = vpack.c.b16 %v754, %v753
        %771 = vmatprep.subr.bf16.mxu0 0
        %772 = vmatpush1.bf16.msra.mxu0 %v755
        %773 = vmatprep.subr.bf16.mxu0 0
        %774 = vmatpush1.bf16.msra.mxu0 %v756
        %775 = vmatprep.subr.bf16.mxu0 0
        %776 = vmatpush1.bf16.msra.mxu0 %v757
        %777 = vmatprep.subr.bf16.mxu0 0
        %778 = vmatpush1.bf16.msra.mxu0 %v758
        %779 = vmatprep.subr.bf16.mxu0 0
        %780 = vmatpush1.bf16.msra.mxu0 %v759
        %781 = vmatprep.subr.bf16.mxu0 0
        %782 = vmatpush1.bf16.msra.mxu0 %v760
        %783 = vmatprep.subr.bf16.mxu0 0
        %784 = vmatpush1.bf16.msra.mxu0 %v761
        %785 = vmatprep.subr.bf16.mxu0 0
        %786 = vmatpush1.bf16.msra.mxu0 %v762
        %787 = vmatprep.subr.bf16.mxu0 0
        %788 = vmatpush1.bf16.msra.mxu0 0
        %789 = vmatprep.subr.bf16.mxu0 0
        %790 = vmatpush1.bf16.msra.mxu0 0
        %791 = vmatprep.subr.bf16.mxu0 0
        %792 = vmatpush1.bf16.msra.mxu0 0
        %793 = vmatprep.subr.bf16.mxu0 0
        %794 = vmatpush1.bf16.msra.mxu0 0
        %795 = vmatprep.subr.bf16.mxu0 0
        %796 = vmatpush1.bf16.msra.mxu0 0
        %797 = vmatprep.subr.bf16.mxu0 0
        %798 = vmatpush1.bf16.msra.mxu0 0
        %799 = vmatprep.subr.bf16.mxu0 0
        %800 = vmatpush1.bf16.msra.mxu0 0
        %801 = vmatprep.subr.bf16.mxu0 0
        %802 = vmatpush1.bf16.msra.mxu0 0
        %803 = vmatprep.mubr.bf16.mxu0 0
        %804 = vmatmul.mubr.bf16.gmra.mrb[0].mxu0 %v706
        %v805 = vpop.f32.mrb[0].mxu0
        %v806 = vadd.f32 0.0, %v805
        %v807 = vpop.f32.mrb[0].mxu0
        %v808 = vpop.f32.mrb[0].mxu0
        %v809 = vpop.f32.mrb[0].mxu0
        %810 = vdwg.mxu0
        %v811 = vxor.u32 %v806, 2147483648
        %v812 = vmul.f32 %v811, 1.442695
        %v813 = vpow.pop %v812
        %v814 = vadd.f32 %v813, 1.0
        %v815 = vrcp.pop %v814
        %v816 = vmul.f32 1.0, %v815
        %v817 = vld [vmem:[%s391 + $0x4] sm:$0x1]
        %v818 = vlaneseq
        %v819 = vshrl.u32 %v818, 7
        %v820 = vsub.s32 0, %v819
        %v821 = vrot.slane %v817, %v820
        %v822 = vadd.f32 %v821, %v596
        %v823 = vmax.f32 %v428, %v822
        %v824 = vsub.f32 %v428, %v823
        %v825 = vmul.f32 %v824, 1.442695
        %v826 = vpow.pop %v825
        %v827 = vsub.f32 %v822, %v823
        %v828 = vmul.f32 %v827, 1.442695
        %v829 = vpow.pop %v828
        %v830 = vmul.f32 %v826, %v424
        %v831 = vmul.f32 %v829, %v701
        %v832 = vadd.f32 %v830, %v831
        %v833 = vmul.f32 %v826, %v426
        %v834 = vadd.f32 %v833, %v829
        %v835 = vld [vmem:[%s391 + $0x5] sm:$0x1]
        %v836 = vlaneseq
        %v837 = vshrl.u32 %v836, 7
        %v838 = vsub.s32 0, %v837
        %v839 = vrot.slane %v835, %v838
        %v840 = vadd.f32 %v428, %v839
        %v841 = vmax.f32 %v840, %v596
        %v842 = vsub.f32 %v840, %v841
        %v843 = vmul.f32 %v842, 1.442695
        %v844 = vpow.pop %v843
        %v845 = vsub.f32 %v596, %v841
        %v846 = vmul.f32 %v845, 1.442695
        %v847 = vpow.pop %v846
        %v848 = vmul.f32 %v844, %v424
        %v849 = vmul.f32 %v847, %v701
        %v850 = vadd.f32 %v848, %v849
        %v851 = vmul.f32 %v844, %v426
        %v852 = vadd.f32 %v851, %v847
        %v853 = vmul.f32 %v816, %v832
        %v854 = vrcp.pop %v834
        %v855 = vmul.f32 %v853, %v854
        %v856 = vpack.c.bf16 %v855, %v855
        %v857 = vld [vmem:[%s323 + $0xc] sm:$0xf]
        %v858 = vld [vmem:[%s323 + $0x28] sm:$0xf]
        %v859 = vld [vmem:[%s323 + $0x44] sm:$0xf]
        %v860 = vld [vmem:[%s323 + $0x60] sm:$0xf]
        %v861 = vld [vmem:[%s323 + $0x7c] sm:$0xf]
        %v862 = vld [vmem:[%s323 + $0x98] sm:$0xf]
        %v863 = vld [vmem:[%s323 + $0xb4] sm:$0xf]
        %v864 = vld [vmem:[%s323 + $0xd0] sm:$0xf]
        %v865 = vld [vmem:[%s323 + $0xec] sm:$0xf]
        %v866 = vld [vmem:[%s323 + $0x108] sm:$0xf]
        %v867 = vld [vmem:[%s323 + $0x124] sm:$0xf]
        %v868 = vld [vmem:[%s323 + $0x140] sm:$0xf]
        %v869 = vld [vmem:[%s323 + $0x15c] sm:$0xf]
        %v870 = vld [vmem:[%s323 + $0x178] sm:$0xf]
        %v871 = vld [vmem:[%s323 + $0x194] sm:$0xf]
        %v872 = vld [vmem:[%s323 + $0x1b0] sm:$0xf]
        %v889 = vunpack.c.l.b16 %v857
        %v890 = vunpack.c.l.b16 %v858
        %v891 = vunpack.c.l.b16 %v859
        %v892 = vunpack.c.l.b16 %v860
        %v893 = vunpack.c.l.b16 %v861
        %v894 = vunpack.c.l.b16 %v862
        %v895 = vunpack.c.l.b16 %v863
        %v896 = vunpack.c.l.b16 %v864
        %v897 = vunpack.c.l.b16 %v865
        %v898 = vunpack.c.l.b16 %v866
        %v899 = vunpack.c.l.b16 %v867
        %v900 = vunpack.c.l.b16 %v868
        %v901 = vunpack.c.l.b16 %v869
        %v902 = vunpack.c.l.b16 %v870
        %v903 = vunpack.c.l.b16 %v871
        %v904 = vunpack.c.l.b16 %v872
        %v905 = vpack.c.b16 %v890, %v889
        %v906 = vpack.c.b16 %v892, %v891
        %v907 = vpack.c.b16 %v894, %v893
        %v908 = vpack.c.b16 %v896, %v895
        %v909 = vpack.c.b16 %v898, %v897
        %v910 = vpack.c.b16 %v900, %v899
        %v911 = vpack.c.b16 %v902, %v901
        %v912 = vpack.c.b16 %v904, %v903
        %921 = vmatprep.subr.bf16.mxu0 0
        %922 = vmatpush1.bf16.msra.mxu0 %v905
        %923 = vmatprep.subr.bf16.mxu0 0
        %924 = vmatpush1.bf16.msra.mxu0 %v906
        %925 = vmatprep.subr.bf16.mxu0 0
        %926 = vmatpush1.bf16.msra.mxu0 %v907
        %927 = vmatprep.subr.bf16.mxu0 0
        %928 = vmatpush1.bf16.msra.mxu0 %v908
        %929 = vmatprep.subr.bf16.mxu0 0
        %930 = vmatpush1.bf16.msra.mxu0 %v909
        %931 = vmatprep.subr.bf16.mxu0 0
        %932 = vmatpush1.bf16.msra.mxu0 %v910
        %933 = vmatprep.subr.bf16.mxu0 0
        %934 = vmatpush1.bf16.msra.mxu0 %v911
        %935 = vmatprep.subr.bf16.mxu0 0
        %936 = vmatpush1.bf16.msra.mxu0 %v912
        %937 = vmatprep.subr.bf16.mxu0 0
        %938 = vmatpush1.bf16.msra.mxu0 0
        %939 = vmatprep.subr.bf16.mxu0 0
        %940 = vmatpush1.bf16.msra.mxu0 0
        %941 = vmatprep.subr.bf16.mxu0 0
        %942 = vmatpush1.bf16.msra.mxu0 0
        %943 = vmatprep.subr.bf16.mxu0 0
        %944 = vmatpush1.bf16.msra.mxu0 0
        %945 = vmatprep.subr.bf16.mxu0 0
        %946 = vmatpush1.bf16.msra.mxu0 0
        %947 = vmatprep.subr.bf16.mxu0 0
        %948 = vmatpush1.bf16.msra.mxu0 0
        %949 = vmatprep.subr.bf16.mxu0 0
        %950 = vmatpush1.bf16.msra.mxu0 0
        %951 = vmatprep.subr.bf16.mxu0 0
        %952 = vmatpush1.bf16.msra.mxu0 0
        %953 = vmatprep.mubr.bf16.mxu0 0
        %954 = vmatmul.mubr.bf16.gmra.mrb[0].mxu0 %v856
        %v955 = vpop.f32.mrb[0].mxu0
        %v956 = vadd.f32 0.0, %v955
        %v957 = vpop.f32.mrb[0].mxu0
        %v958 = vpop.f32.mrb[0].mxu0
        %v959 = vpop.f32.mrb[0].mxu0
        %960 = vdwg.mxu0
        %v961 = vadd.f32 %v423, %v956
        %v962 = vld [vmem:[%s391 + $0x2] sm:$0x1]
        %v963 = vld [vmem:[%s391 + $0x3] sm:$0x1]
        %964 = vadd.xlane.f32.xlu0 %v961
        %v965 = vpop.xlane.xlu0 %964
        %v966 = vmul.f32 %v965, %v437
        %v967 = vsub.f32 %v961, %v966
        %v968 = vmul.f32 %v967, %v967
        %969 = vadd.xlane.f32.xlu0 %v968
        %v970 = vpop.xlane.xlu0 %969
        %v971 = vmul.f32 %v970, %v437
        %v972 = vadd.f32 %v971, 1e-05
        %v973 = vrsqrt.pop %v972
        %v974 = vmul.f32 %v967, %v973
        %v975 = vlaneseq
        %v976 = vshrl.u32 %v975, 7
        %v977 = vsub.s32 0, %v976
        %v978 = vrot.slane %v962, %v977
        %v979 = vmul.f32 %v974, %v978
        %v980 = vlaneseq
        %v981 = vshrl.u32 %v980, 7
        %v982 = vsub.s32 0, %v981
        %v983 = vrot.slane %v963, %v982
        %v984 = vadd.f32 %v979, %v983
        %v985 = vld [vmem:[%s391 + $0xc] sm:$0x1]
        %v986 = vlaneseq
        %v987 = vshrl.u32 %v986, 7
        %v988 = vsub.s32 0, %v987
        %v989 = vrot.slane %v985, %v988
        %v990 = vmul.f32 %v984, %v989
        %v991 = vld [vmem:[%s391 + $0xd] sm:$0x1]
        %v992 = vlaneseq
        %v993 = vshrl.u32 %v992, 7
        %v994 = vsub.s32 0, %v993
        %v995 = vrot.slane %v991, %v994
        %v996 = vmul.f32 %v432, %v995
        %v997 = vadd.f32 %v990, %v996
        %v998 = vld [vmem:[%s391 + $0xe] sm:$0x1]
        %v999 = vlaneseq
        %v1000 = vshrl.u32 %v999, 7
        %v1001 = vsub.s32 0, %v1000
        %v1002 = vrot.slane %v998, %v1001
        %v1003 = vmul.f32 %v984, %v1002
        %v1004 = vld [vmem:[%s391 + $0xf] sm:$0x1]
        %v1005 = vlaneseq
        %v1006 = vshrl.u32 %v1005, 7
        %v1007 = vsub.s32 0, %v1006
        %v1008 = vrot.slane %v1004, %v1007
        %v1009 = vmul.f32 %v432, %v1008
        %v1010 = vadd.f32 %v1003, %v1009
        %v1011 = vpack.c.bf16 %v1010, %v1010
        %v1012 = vld [vmem:[%s323 + $0x10] sm:$0xf]
        %v1013 = vld [vmem:[%s323 + $0x2c] sm:$0xf]
        %v1014 = vld [vmem:[%s323 + $0x48] sm:$0xf]
        %v1015 = vld [vmem:[%s323 + $0x64] sm:$0xf]
        %v1016 = vld [vmem:[%s323 + $0x80] sm:$0xf]
        %v1017 = vld [vmem:[%s323 + $0x9c] sm:$0xf]
        %v1018 = vld [vmem:[%s323 + $0xb8] sm:$0xf]
        %v1019 = vld [vmem:[%s323 + $0xd4] sm:$0xf]
        %v1020 = vld [vmem:[%s323 + $0xf0] sm:$0xf]
        %v1021 = vld [vmem:[%s323 + $0x10c] sm:$0xf]
        %v1022 = vld [vmem:[%s323 + $0x128] sm:$0xf]
        %v1023 = vld [vmem:[%s323 + $0x144] sm:$0xf]
        %v1024 = vld [vmem:[%s323 + $0x160] sm:$0xf]
        %v1025 = vld [vmem:[%s323 + $0x17c] sm:$0xf]
        %v1026 = vld [vmem:[%s323 + $0x198] sm:$0xf]
        %v1027 = vld [vmem:[%s323 + $0x1b4] sm:$0xf]
        %v1044 = vunpack.c.l.b16 %v1012
        %v1045 = vunpack.c.l.b16 %v1013
        %v1046 = vunpack.c.l.b16 %v1014
        %v1047 = vunpack.c.l.b16 %v1015
        %v1048 = vunpack.c.l.b16 %v1016
        %v1049 = vunpack.c.l.b16 %v1017
        %v1050 = vunpack.c.l.b16 %v1018
        %v1051 = vunpack.c.l.b16 %v1019
        %v1052 = vunpack.c.l.b16 %v1020
        %v1053 = vunpack.c.l.b16 %v1021
        %v1054 = vunpack.c.l.b16 %v1022
        %v1055 = vunpack.c.l.b16 %v1023
        %v1056 = vunpack.c.l.b16 %v1024
        %v1057 = vunpack.c.l.b16 %v1025
        %v1058 = vunpack.c.l.b16 %v1026
        %v1059 = vunpack.c.l.b16 %v1027
        %v1060 = vpack.c.b16 %v1045, %v1044
        %v1061 = vpack.c.b16 %v1047, %v1046
        %v1062 = vpack.c.b16 %v1049, %v1048
        %v1063 = vpack.c.b16 %v1051, %v1050
        %v1064 = vpack.c.b16 %v1053, %v1052
        %v1065 = vpack.c.b16 %v1055, %v1054
        %v1066 = vpack.c.b16 %v1057, %v1056
        %v1067 = vpack.c.b16 %v1059, %v1058
        %1076 = vmatprep.subr.bf16.mxu0 0
        %1077 = vmatpush1.bf16.msra.mxu0 %v1060
        %1078 = vmatprep.subr.bf16.mxu0 0
        %1079 = vmatpush1.bf16.msra.mxu0 %v1061
        %1080 = vmatprep.subr.bf16.mxu0 0
        %1081 = vmatpush1.bf16.msra.mxu0 %v1062
        %1082 = vmatprep.subr.bf16.mxu0 0
        %1083 = vmatpush1.bf16.msra.mxu0 %v1063
        %1084 = vmatprep.subr.bf16.mxu0 0
        %1085 = vmatpush1.bf16.msra.mxu0 %v1064
        %1086 = vmatprep.subr.bf16.mxu0 0
        %1087 = vmatpush1.bf16.msra.mxu0 %v1065
        %1088 = vmatprep.subr.bf16.mxu0 0
        %1089 = vmatpush1.bf16.msra.mxu0 %v1066
        %1090 = vmatprep.subr.bf16.mxu0 0
        %1091 = vmatpush1.bf16.msra.mxu0 %v1067
        %1092 = vmatprep.subr.bf16.mxu0 0
        %1093 = vmatpush1.bf16.msra.mxu0 0
        %1094 = vmatprep.subr.bf16.mxu0 0
        %1095 = vmatpush1.bf16.msra.mxu0 0
        %1096 = vmatprep.subr.bf16.mxu0 0
        %1097 = vmatpush1.bf16.msra.mxu0 0
        %1098 = vmatprep.subr.bf16.mxu0 0
        %1099 = vmatpush1.bf16.msra.mxu0 0
        %1100 = vmatprep.subr.bf16.mxu0 0
        %1101 = vmatpush1.bf16.msra.mxu0 0
        %1102 = vmatprep.subr.bf16.mxu0 0
        %1103 = vmatpush1.bf16.msra.mxu0 0
        %1104 = vmatprep.subr.bf16.mxu0 0
        %1105 = vmatpush1.bf16.msra.mxu0 0
        %1106 = vmatprep.subr.bf16.mxu0 0
        %1107 = vmatpush1.bf16.msra.mxu0 0
        %1108 = vmatprep.mubr.bf16.mxu0 0
        %1109 = vmatmul.mubr.bf16.gmra.mrb[0].mxu0 %v1011
        %v1110 = vpop.f32.mrb[0].mxu0
        %v1111 = vadd.f32 0.0, %v1110
        %v1112 = vpop.f32.mrb[0].mxu0
        %v1113 = vpop.f32.mrb[0].mxu0
        %v1114 = vpop.f32.mrb[0].mxu0
        %1115 = vdwg.mxu0
        %v1116 = vxor.u32 %v1111, 2147483648
        %v1117 = vmul.f32 %v1116, 1.442695
        %v1118 = vpow.pop %v1117
        %v1119 = vadd.f32 %v1118, 1.0
        %v1120 = vrcp.pop %v1119
        %v1121 = vmul.f32 1.0, %v1120
        %v1122 = vpack.c.bf16 %v997, %v997
        %v1123 = vld [vmem:[%s323 + $0x14] sm:$0xff]
        %v1124 = vld [vmem:[%s323 + $0x30] sm:$0xff]
        %v1125 = vld [vmem:[%s323 + $0x4c] sm:$0xff]
        %v1126 = vld [vmem:[%s323 + $0x68] sm:$0xff]
        %v1127 = vld [vmem:[%s323 + $0x84] sm:$0xff]
        %v1128 = vld [vmem:[%s323 + $0xa0] sm:$0xff]
        %v1129 = vld [vmem:[%s323 + $0xbc] sm:$0xff]
        %v1130 = vld [vmem:[%s323 + $0xd8] sm:$0xff]
        %v1131 = vld [vmem:[%s323 + $0xf4] sm:$0xff]
        %v1132 = vld [vmem:[%s323 + $0x110] sm:$0xff]
        %v1133 = vld [vmem:[%s323 + $0x12c] sm:$0xff]
        %v1134 = vld [vmem:[%s323 + $0x148] sm:$0xff]
        %v1135 = vld [vmem:[%s323 + $0x164] sm:$0xff]
        %v1136 = vld [vmem:[%s323 + $0x180] sm:$0xff]
        %v1137 = vld [vmem:[%s323 + $0x19c] sm:$0xff]
        %v1138 = vld [vmem:[%s323 + $0x1b8] sm:$0xff]
        %v1155 = vunpack.c.l.b16 %v1123
        %v1156 = vunpack.c.h.b16 %v1123
        %v1157 = vunpack.c.l.b16 %v1124
        %v1158 = vunpack.c.h.b16 %v1124
        %v1159 = vunpack.c.l.b16 %v1125
        %v1160 = vunpack.c.h.b16 %v1125
        %v1161 = vunpack.c.l.b16 %v1126
        %v1162 = vunpack.c.h.b16 %v1126
        %v1163 = vunpack.c.l.b16 %v1127
        %v1164 = vunpack.c.h.b16 %v1127
        %v1165 = vunpack.c.l.b16 %v1128
        %v1166 = vunpack.c.h.b16 %v1128
        %v1167 = vunpack.c.l.b16 %v1129
        %v1168 = vunpack.c.h.b16 %v1129
        %v1169 = vunpack.c.l.b16 %v1130
        %v1170 = vunpack.c.h.b16 %v1130
        %v1171 = vunpack.c.l.b16 %v1131
        %v1172 = vunpack.c.h.b16 %v1131
        %v1173 = vunpack.c.l.b16 %v1132
        %v1174 = vunpack.c.h.b16 %v1132
        %v1175 = vunpack.c.l.b16 %v1133
        %v1176 = vunpack.c.h.b16 %v1133
        %v1177 = vunpack.c.l.b16 %v1134
        %v1178 = vunpack.c.h.b16 %v1134
        %v1179 = vunpack.c.l.b16 %v1135
        %v1180 = vunpack.c.h.b16 %v1135
        %v1181 = vunpack.c.l.b16 %v1136
        %v1182 = vunpack.c.h.b16 %v1136
        %v1183 = vunpack.c.l.b16 %v1137
        %v1184 = vunpack.c.h.b16 %v1137
        %v1185 = vunpack.c.l.b16 %v1138
        %v1186 = vunpack.c.h.b16 %v1138
        %v1187 = vpack.c.b16 %v1157, %v1155
        %v1188 = vpack.c.b16 %v1158, %v1156
        %v1189 = vpack.c.b16 %v1161, %v1159
        %v1190 = vpack.c.b16 %v1162, %v1160
        %v1191 = vpack.c.b16 %v1165, %v1163
        %v1192 = vpack.c.b16 %v1166, %v1164
        %v1193 = vpack.c.b16 %v1169, %v1167
        %v1194 = vpack.c.b16 %v1170, %v1168
        %v1195 = vpack.c.b16 %v1173, %v1171
        %v1196 = vpack.c.b16 %v1174, %v1172
        %v1197 = vpack.c.b16 %v1177, %v1175
        %v1198 = vpack.c.b16 %v1178, %v1176
        %v1199 = vpack.c.b16 %v1181, %v1179
        %v1200 = vpack.c.b16 %v1182, %v1180
        %v1201 = vpack.c.b16 %v1185, %v1183
        %v1202 = vpack.c.b16 %v1186, %v1184
        %1219 = vmatprep.subr.bf16.mxu0 %v1188
        %1220 = vmatpush1.bf16.msra.mxu0 %v1187
        %1221 = vmatprep.subr.bf16.mxu0 %v1190
        %1222 = vmatpush1.bf16.msra.mxu0 %v1189
        %1223 = vmatprep.subr.bf16.mxu0 %v1192
        %1224 = vmatpush1.bf16.msra.mxu0 %v1191
        %1225 = vmatprep.subr.bf16.mxu0 %v1194
        %1226 = vmatpush1.bf16.msra.mxu0 %v1193
        %1227 = vmatprep.subr.bf16.mxu0 %v1196
        %1228 = vmatpush1.bf16.msra.mxu0 %v1195
        %1229 = vmatprep.subr.bf16.mxu0 %v1198
        %1230 = vmatpush1.bf16.msra.mxu0 %v1197
        %1231 = vmatprep.subr.bf16.mxu0 %v1200
        %1232 = vmatpush1.bf16.msra.mxu0 %v1199
        %1233 = vmatprep.subr.bf16.mxu0 %v1202
        %1234 = vmatpush1.bf16.msra.mxu0 %v1201
        %1235 = vmatprep.subr.bf16.mxu0 0
        %1236 = vmatpush1.bf16.msra.mxu0 0
        %1237 = vmatprep.subr.bf16.mxu0 0
        %1238 = vmatpush1.bf16.msra.mxu0 0
        %1239 = vmatprep.subr.bf16.mxu0 0
        %1240 = vmatpush1.bf16.msra.mxu0 0
        %1241 = vmatprep.subr.bf16.mxu0 0
        %1242 = vmatpush1.bf16.msra.mxu0 0
        %1243 = vmatprep.subr.bf16.mxu0 0
        %1244 = vmatpush1.bf16.msra.mxu0 0
        %1245 = vmatprep.subr.bf16.mxu0 0
        %1246 = vmatpush1.bf16.msra.mxu0 0
        %1247 = vmatprep.subr.bf16.mxu0 0
        %1248 = vmatpush1.bf16.msra.mxu0 0
        %1249 = vmatprep.subr.bf16.mxu0 0
        %1250 = vmatpush1.bf16.msra.mxu0 0
        %1251 = vmatprep.mubr.bf16.mxu0 0
        %1252 = vmatmul.mubr.bf16.gmra.mrb[0].mxu0 %v1122
        %v1253 = vpop.f32.mrb[0].mxu0
        %v1254 = vadd.f32 0.0, %v1253
        %v1255 = vpop.f32.mrb[0].mxu0
        %v1256 = vadd.f32 0.0, %v1255
        %v1257 = vpop.f32.mrb[0].mxu0
        %v1258 = vpop.f32.mrb[0].mxu0
        %1259 = vdwg.mxu0
        %v1260 = vmax.f32 %v1254, 0.0
        %v1261 = vmax.f32 %v1256, 0.0
        %v1262 = vmul.f32 %v1260, %v1260
        %v1263 = vmul.f32 %v1261, %v1261
        %v1264 = vpack.c.bf16 %v1262, %v1262
        %v1265 = vpack.c.bf16 %v1263, %v1263
        %v1266 = vld [vmem:[%s332] sm:$0xf]
        %v1267 = vld [vmem:[%s332 + $0x4] sm:$0xf]
        %v1268 = vld [vmem:[%s332 + $0x8] sm:$0xf]
        %v1269 = vld [vmem:[%s332 + $0xc] sm:$0xf]
        %v1270 = vld [vmem:[%s332 + $0x10] sm:$0xf]
        %v1271 = vld [vmem:[%s332 + $0x14] sm:$0xf]
        %v1272 = vld [vmem:[%s332 + $0x18] sm:$0xf]
        %v1273 = vld [vmem:[%s332 + $0x1c] sm:$0xf]
        %v1274 = vld [vmem:[%s332 + $0x20] sm:$0xf]
        %v1275 = vld [vmem:[%s332 + $0x24] sm:$0xf]
        %v1276 = vld [vmem:[%s332 + $0x28] sm:$0xf]
        %v1277 = vld [vmem:[%s332 + $0x2c] sm:$0xf]
        %v1278 = vld [vmem:[%s332 + $0x30] sm:$0xf]
        %v1279 = vld [vmem:[%s332 + $0x34] sm:$0xf]
        %v1280 = vld [vmem:[%s332 + $0x38] sm:$0xf]
        %v1281 = vld [vmem:[%s332 + $0x3c] sm:$0xf]
        %v1282 = vld [vmem:[%s332 + $0x40] sm:$0xf]
        %v1283 = vld [vmem:[%s332 + $0x44] sm:$0xf]
        %v1284 = vld [vmem:[%s332 + $0x48] sm:$0xf]
        %v1285 = vld [vmem:[%s332 + $0x4c] sm:$0xf]
        %v1286 = vld [vmem:[%s332 + $0x50] sm:$0xf]
        %v1287 = vld [vmem:[%s332 + $0x54] sm:$0xf]
        %v1288 = vld [vmem:[%s332 + $0x58] sm:$0xf]
        %v1289 = vld [vmem:[%s332 + $0x5c] sm:$0xf]
        %v1290 = vld [vmem:[%s332 + $0x60] sm:$0xf]
        %v1291 = vld [vmem:[%s332 + $0x64] sm:$0xf]
        %v1292 = vld [vmem:[%s332 + $0x68] sm:$0xf]
        %v1293 = vld [vmem:[%s332 + $0x6c] sm:$0xf]
        %v1294 = vld [vmem:[%s332 + $0x70] sm:$0xf]
        %v1295 = vld [vmem:[%s332 + $0x74] sm:$0xf]
        %v1296 = vld [vmem:[%s332 + $0x78] sm:$0xf]
        %v1297 = vld [vmem:[%s332 + $0x7c] sm:$0xf]
        %v1330 = vunpack.c.l.b16 %v1266
        %v1331 = vunpack.c.l.b16 %v1267
        %v1332 = vunpack.c.l.b16 %v1268
        %v1333 = vunpack.c.l.b16 %v1269
        %v1334 = vunpack.c.l.b16 %v1270
        %v1335 = vunpack.c.l.b16 %v1271
        %v1336 = vunpack.c.l.b16 %v1272
        %v1337 = vunpack.c.l.b16 %v1273
        %v1338 = vunpack.c.l.b16 %v1274
        %v1339 = vunpack.c.l.b16 %v1275
        %v1340 = vunpack.c.l.b16 %v1276
        %v1341 = vunpack.c.l.b16 %v1277
        %v1342 = vunpack.c.l.b16 %v1278
        %v1343 = vunpack.c.l.b16 %v1279
        %v1344 = vunpack.c.l.b16 %v1280
        %v1345 = vunpack.c.l.b16 %v1281
        %v1346 = vunpack.c.l.b16 %v1282
        %v1347 = vunpack.c.l.b16 %v1283
        %v1348 = vunpack.c.l.b16 %v1284
        %v1349 = vunpack.c.l.b16 %v1285
        %v1350 = vunpack.c.l.b16 %v1286
        %v1351 = vunpack.c.l.b16 %v1287
        %v1352 = vunpack.c.l.b16 %v1288
        %v1353 = vunpack.c.l.b16 %v1289
        %v1354 = vunpack.c.l.b16 %v1290
        %v1355 = vunpack.c.l.b16 %v1291
        %v1356 = vunpack.c.l.b16 %v1292
        %v1357 = vunpack.c.l.b16 %v1293
        %v1358 = vunpack.c.l.b16 %v1294
        %v1359 = vunpack.c.l.b16 %v1295
        %v1360 = vunpack.c.l.b16 %v1296
        %v1361 = vunpack.c.l.b16 %v1297
        %v1362 = vpack.c.b16 %v1331, %v1330
        %v1363 = vpack.c.b16 %v1333, %v1332
        %v1364 = vpack.c.b16 %v1335, %v1334
        %v1365 = vpack.c.b16 %v1337, %v1336
        %v1366 = vpack.c.b16 %v1339, %v1338
        %v1367 = vpack.c.b16 %v1341, %v1340
        %v1368 = vpack.c.b16 %v1343, %v1342
        %v1369 = vpack.c.b16 %v1345, %v1344
        %v1370 = vpack.c.b16 %v1347, %v1346
        %v1371 = vpack.c.b16 %v1349, %v1348
        %v1372 = vpack.c.b16 %v1351, %v1350
        %v1373 = vpack.c.b16 %v1353, %v1352
        %v1374 = vpack.c.b16 %v1355, %v1354
        %v1375 = vpack.c.b16 %v1357, %v1356
        %v1376 = vpack.c.b16 %v1359, %v1358
        %v1377 = vpack.c.b16 %v1361, %v1360
        %1394 = vmatprep.subr.bf16.mxu0 0
        %1395 = vmatpush1.bf16.msra.mxu0 %v1362
        %1396 = vmatprep.subr.bf16.mxu0 0
        %1397 = vmatpush1.bf16.msra.mxu0 %v1363
        %1398 = vmatprep.subr.bf16.mxu0 0
        %1399 = vmatpush1.bf16.msra.mxu0 %v1364
        %1400 = vmatprep.subr.bf16.mxu0 0
        %1401 = vmatpush1.bf16.msra.mxu0 %v1365
        %1402 = vmatprep.subr.bf16.mxu0 0
        %1403 = vmatpush1.bf16.msra.mxu0 %v1366
        %1404 = vmatprep.subr.bf16.mxu0 0
        %1405 = vmatpush1.bf16.msra.mxu0 %v1367
        %1406 = vmatprep.subr.bf16.mxu0 0
        %1407 = vmatpush1.bf16.msra.mxu0 %v1368
        %1408 = vmatprep.subr.bf16.mxu0 0
        %1409 = vmatpush1.bf16.msra.mxu0 %v1369
        %1410 = vmatprep.subr.bf16.mxu0 0
        %1411 = vmatpush1.bf16.msra.mxu0 %v1370
        %1412 = vmatprep.subr.bf16.mxu0 0
        %1413 = vmatpush1.bf16.msra.mxu0 %v1371
        %1414 = vmatprep.subr.bf16.mxu0 0
        %1415 = vmatpush1.bf16.msra.mxu0 %v1372
        %1416 = vmatprep.subr.bf16.mxu0 0
        %1417 = vmatpush1.bf16.msra.mxu0 %v1373
        %1418 = vmatprep.subr.bf16.mxu0 0
        %1419 = vmatpush1.bf16.msra.mxu0 %v1374
        %1420 = vmatprep.subr.bf16.mxu0 0
        %1421 = vmatpush1.bf16.msra.mxu0 %v1375
        %1422 = vmatprep.subr.bf16.mxu0 0
        %1423 = vmatpush1.bf16.msra.mxu0 %v1376
        %1424 = vmatprep.subr.bf16.mxu0 0
        %1425 = vmatpush1.bf16.msra.mxu0 %v1377
        %1426 = vmatprep.mubr.bf16.mxu0 %v1265
        %1427 = vmatmul.mubr.bf16.gmra.mrb[0].mxu0 %v1264
        %v1428 = vpop.f32.mrb[0].mxu0
        %v1429 = vadd.f32 0.0, %v1428
        %v1430 = vpop.f32.mrb[0].mxu0
        %v1431 = vpop.f32.mrb[0].mxu0
        %v1432 = vpop.f32.mrb[0].mxu0
        %1433 = vdwg.mxu0
        %v1434 = vmul.f32 %v1121, %v1429
        %v1435 = vadd.f32 %v961, %v1434
        %1436 = vst [vmem:[#allocation8] sm:$0xff] %v1435
        %1437 = vst [vmem:[%s386] sm:$0xff] %v850
        %s1438 = scalar_lea.vmem %s386, 8 [#allocation9]
        %1439 = vst [vmem:[%s1438] sm:$0xff] %v852
        %s1440 = scalar_lea.vmem %s386, 16 [#allocation9]
        %1441 = vst [vmem:[%s1440] sm:$0xff] %v841
        %s1442 = scalar_lea.vmem %s386, 24 [#allocation9]
        %1443 = vst [vmem:[%s1442] sm:$0xff] %v456
        %s1444 = scalar_lea.vmem %s386, 32 [#allocation9]
        %1445 = vst [vmem:[%s1444] sm:$0xff] %v984
        %s1446 = sand.u32 %s204, 1
        %s1447 = scalar_lea.sflag [#allocation10], %s1446
        %s1448 = sand.u32 %s204, 1
        %s1449 = smul.addr %s1448, 40
        %s1450 = scalar_lea.vmem [#allocation9], %s1449
        // Predicated region
        $region61: #{tpu_custom_call.1} parent=43 // pred_check
          %p1451 = pneg %p188
        $region62: #{tpu_custom_call.1} parent=43 // pred_check_branch
          %1453 = sbr.rel (%p1451) target = $region64
        $region63: #{tpu_custom_call.1} parent=43 // pred_region
          %s1455 = ssub.s32 128, 128
          %1456 = vsyncadd [#allocation4], %s1455
          %s1458 = sshll.u32 [#allocation8], 4
          %s1459 = int_to_ptr.vmem [resolvable:$true] %s1458
          %1461 = dma.vmem_to_hbm [thread:$0]  %s1459, 128, %s6, [#allocation4]
        $region64: #{tpu_custom_call.1} parent=43 // pred_fallthru
          _
        // Predicated region
        $region65: #{tpu_custom_call.1} parent=43 // pred_check
          %p1462 = pneg %p214
        $region66: #{tpu_custom_call.1} parent=43 // pred_check_branch
          %1464 = sbr.rel (%p1462) target = $region68
        $region67: #{tpu_custom_call.1} parent=43 // pred_region
          %s1466 = ssub.s32 640, 640
          %1467 = vsyncadd %s1447, %s1466
          %s1468 = smul.addr %s29, 128
          %s1469 = scalar_lea.hbm %s7, %s1468
          %s1470 = sshll.u32 %s1450, 4
          %s1471 = int_to_ptr.vmem [resolvable:$true] %s1470
          %1476 = dma.vmem_to_hbm [thread:$0]  %s1471, 640, %s1469, %s1447, 128, 256, 8
        $region68: #{tpu_custom_call.1} parent=43 // pred_fallthru
          _
        // Predicated region
        $region69: #{tpu_custom_call.1} parent=43 // pred_check
          %p1477 = pneg %p188
        $region70: #{tpu_custom_call.1} parent=43 // pred_check_branch
          %1479 = sbr.rel (%p1477) target = $region72
        $region71: #{tpu_custom_call.1} parent=43 // pred_region
          %1480 = dma.done [#allocation4], 128
        $region72: #{tpu_custom_call.1} parent=43 // pred_fallthru
          _
      $region44: #{tpu_custom_call.1} parent=5 // pred_fallthru
        _
      %p1481 = scmp.le.s32.totalorder 2, %s24
      // Predicated region
      $region73: #{tpu_custom_call.1} parent=5 // pred_check
        %p1482 = pneg %p1481
      $region74: #{tpu_custom_call.1} parent=5 // pred_check_branch
        %1484 = sbr.rel (%p1482) target = $region76
      $region75: #{tpu_custom_call.1} parent=5 // pred_region
        %s1485 = ssub.s32 %s24, 2
        // Predicated region
        $region77: #{tpu_custom_call.1} parent=75 // pred_check
          %p1486 = pneg %p220
        $region78: #{tpu_custom_call.1} parent=75 // pred_check_branch
          %1488 = sbr.rel (%p1486) target = $region80
        $region79: #{tpu_custom_call.1} parent=75 // pred_region
          %s1489 = sand.u32 %s205, 1
          %s1490 = scalar_lea.sflag [#allocation10], %s1489
          %s1491 = sand.u32 %s205, 1
          %s1492 = smul.addr %s1491, 40
          %s1493 = scalar_lea.vmem [#allocation9], %s1492
          %1494 = dma.done %s1490, 640
        $region80: #{tpu_custom_call.1} parent=75 // pred_fallthru
          _
      $region76: #{tpu_custom_call.1} parent=5 // pred_fallthru
        _
    $region6: #{tpu_custom_call.1} parent=1 // loop_footer
      %s28 = sadd.s32 1, %s24
    $region7: #{tpu_custom_call.1} parent=1 // loop_footer_branch
      %23 = sbr.rel target = $region3
    $region8: #{tpu_custom_call.1} parent=1 // loop_exit
      _
    %1495 = vsyncpa [#allocation3], 1
    %s1496 = scalar_lea.sflag [#allocation3], 1
    %1497 = vsyncpa %s1496, 1
    %1498 = vsyncpa [#allocation6], 1
    %s1499 = scalar_lea.sflag [#allocation6], 1
    %1500 = vsyncpa %s1499, 1
    %1501 = vsyncpa [#allocation4], 1
    %s1502 = scalar_lea.sflag [#allocation4], 1
    %1503 = vsyncpa %s1502, 1
    %1504 = vsyncpa [#allocation10], 1
    %s1505 = scalar_lea.sflag [#allocation10], 1
    %1506 = vsyncpa %s1505, 1

</llo_original>
